<compile_context>
chip_gen: v6e
topology: v6e:2x2x1
jax: 0.10.0
libtpu: 0.0.40
codegen_flags: <defaults>
</compile_context>

<pallas_src>
import functools
import math

import jax
import jax.numpy as jnp
import numpy as np
from jax import lax
from jax.experimental import pallas as pl
from jax.experimental.pallas import tpu as pltpu


def _round_up(x, m):
    return ((x + m - 1) // m) * m


def _vmem_capacity_bytes():
    try:
        return int(pltpu.get_tpu_info().vmem_capacity_bytes)
    except Exception:
        return 64 * 1024 * 1024            # conservative fallback (v7x-sized)


def _fused_dual_conv_kernel(x_ref, w1_ref, b1_ref, w2_ref, b2_ref, o_ref, ybuf_ref,
                            *, kh, dh, kt, dt, Wp, t_out, pt, d_in, ring, dp_start,
                            skip_w2):
    """One grid step = one (batch, row-tile, depth-step).

    x_ref : (t_in, kw*Cin)       im2col'd input row tile (with halo rows)
    w1_ref: (kh, kw*Cin, Cintp)  spatial taps (kw folded into the contraction)
    b1_ref: (1, Cintp) f32       w2_ref: (kt, Cintp, Coutp)   b2_ref: (1, Coutp) f32
    o_ref : (t_out, Coutp)       output row tile at padded depth dp - dt*(kt-1)
    ybuf  : (ring, t_out, Cintp) VMEM ring of spatially-convolved tiles
    """
    g = pl.program_id(2)
    dp = g + dp_start                       # padded-depth index of the current frame

    # ---- stage 1: spatial conv, one aligned slice + one MXU dot per row tap ----
    acc = jnp.zeros((t_out, b1_ref.shape[-1]), jnp.float32)
    for i in range(kh):
        xs = x_ref[pl.ds(i * dh * Wp, t_out), :]     # offset multiple of Wp (aligned)
        acc += jnp.dot(xs, w1_ref[i], preferred_element_type=jnp.float32)
    acc += b1_ref[...]

    if skip_w2:                              # spatial-only path: no ring, no 2nd conv
        o_ref[...] = acc.astype(o_ref.dtype)
        return

    # NOTE: for the few pure-padding depth steps x_ref holds a clamped real frame;
    # the result is computed anyway and zeroed here (keeps y_cur available for the
    # temporal stage without a branch; at most ~pt wasted steps per (n, tile)).
    is_real = jnp.logical_and(dp >= pt, dp < pt + d_in)
    y_cur = jnp.where(is_real, acc, 0.0).astype(ybuf_ref.dtype)

    if dp_start > 0:                         # pre-zero ring slots of skipped lead pads
        @pl.when(g == 0)
        def _prezero():
            for p in range(dp_start):        # dp_start <= ring - 1
                ybuf_ref[p] = jnp.zeros_like(y_cur)

    ybuf_ref[dp % ring] = y_cur

    # ---- stage 2: temporal conv once all kt taps are resident in the ring ----
    def _temporal():
        d_lo = dp - dt * (kt - 1)
        # newest tap comes straight from the value just computed (no ring reload)
        acc2 = jnp.dot(y_cur, w2_ref[kt - 1], preferred_element_type=jnp.float32)
        for k in range(kt - 1):
            ys = ybuf_ref[(d_lo + k * dt) % ring]
            acc2 += jnp.dot(ys, w2_ref[k], preferred_element_type=jnp.float32)
        o_ref[...] = (acc2 + b2_ref[...]).astype(o_ref.dtype)

    if dp_start >= dt * (kt - 1):
        _temporal()                          # every step emits an output
    else:
        pl.when(dp >= dt * (kt - 1))(_temporal)


def dual_conv3d_forward(x, w1, b1, w2, b2, *, stride=(1, 1, 1), padding=(0, 0, 0),
                        dilation=(1, 1, 1), groups=1, skip_time_conv=False,
                        row_tile=None, mxu_dtype=None):
    """x: (N, Cin, D, H, W) NCDHW -> (N, Cout, Do, Ho, Wo) NCDHW."""
    if groups != 1:
        raise NotImplementedError("TODO(synk): groups > 1 not implemented")
    if tuple(stride) != (1, 1, 1):
        raise NotImplementedError("TODO(synk): stride > 1 not implemented")

    N, Cin, D, H, W = x.shape
    Cint, _, _, kh, kw = w1.shape                         # (Cint, Cin, 1, kh, kw)
    pt, ph, pw = padding
    dt, dh, dw = dilation
    out_dtype = x.dtype
    # TODO(synk): default cdtype to bfloat16 on v6e/v7x (f32 accumulation) to hit the
    # 256x256 MXU peak; kept at the input dtype to preserve the module's numerics.
    cdtype = jnp.dtype(out_dtype) if mxu_dtype is None else jnp.dtype(mxu_dtype)

    if skip_time_conv:
        kt, dt, pt = 1, 1, 0
        Cout = Cint
    else:
        Cout, _, kt, _, _ = w2.shape                      # (Cout, Cint, kt, 1, 1)

    # lane-dense channel padding (unmasked vst, full MXU lanes); stripped at the end
    Cintp = _round_up(Cint, 128)
    Coutp = _round_up(Cout, 128)
    K1 = kw * Cin

    # output extents (stride == 1)
    Hp2, Wp0 = H + 2 * ph, W + 2 * pw
    Ho = Hp2 - dh * (kh - 1)
    Wo = Wp0 - dw * (kw - 1)
    Dp = D + 2 * pt
    Do = Dp - dt * (kt - 1)
    assert Ho >= 1 and Wo >= 1 and Do >= 1, "kernel/dilation too large for input"

    esz = jnp.dtype(cdtype).itemsize
    osz = jnp.dtype(out_dtype).itemsize
    align = max(8, 32 // min(esz, osz))    # sublane packing of the narrowest dtype
    Wp = _round_up(Wo, align)              # aligned row pitch, in OUTPUT column units
    halo = dh * (kh - 1)
    ring = dt * (kt - 1) + 1

    # ---- weights: (kh, kw*Cin, Cintp) spatial / (kt, Cintp, Coutp) temporal ----
    w1h = jnp.transpose(w1[:, :, 0], (2, 3, 1, 0)).reshape(kh, K1, Cint)
    w1h = jnp.pad(w1h, ((0, 0), (0, 0), (0, Cintp - Cint))).astype(cdtype)
    if b1 is None:
        b1 = jnp.zeros((Cint,), jnp.float32)
    b1h = jnp.pad(b1.astype(jnp.float32), (0, Cintp - Cint)).reshape(1, Cintp)

    if skip_time_conv:
        w2h = jnp.zeros((1, Cintp, Coutp), cdtype)        # never read in the kernel
        b2h = jnp.zeros((1, Coutp), jnp.float32)
    else:
        if b2 is None:
            b2 = jnp.zeros((Cout,), jnp.float32)
        w2h = jnp.transpose(w2[:, :, :, 0, 0], (2, 1, 0))             # (kt, Cint, Cout)
        w2h = jnp.pad(w2h, ((0, 0), (0, Cintp - Cint), (0, Coutp - Cout))).astype(cdtype)
        b2h = jnp.pad(b2.astype(jnp.float32), (0, Coutp - Cout)).reshape(1, Coutp)

    # ---- VMEM-aware row tiling ----
    vmem_cap = _vmem_capacity_bytes()
    w_bytes = 2 * (w1h.size + w2h.size) * esz + 2 * (b1h.size + b2h.size) * 4

    def footprint(tr):
        to, ti = tr * Wp, (tr + halo) * Wp
        ring_b = 0 if skip_time_conv else ring * to * Cintp * esz
        tmp_b = 3 * to * max(Cintp, Coutp) * 4 + 2 * to * K1 * esz   # f32 acc temps
        return w_bytes + 2 * ti * K1 * esz + 2 * to * Coutp * osz + ring_b + tmp_b

    if row_tile is not None:
        TR = max(1, min(int(row_tile), Ho))
    else:
        TR = Ho
        if N == 1 and Ho >= 16:
            TR = pl.cdiv(Ho, 2)            # >= 2 row tiles so both v7x TCs get work
    budget = (3 * vmem_cap) // 5
    while TR > 8 and footprint(TR) > budget:
        TR = max(8, (TR + 1) // 2)

    T = pl.cdiv(Ho, TR)
    t_out = TR * Wp
    t_in = (TR + halo) * Wp
    Hrows = T * TR + halo
    vmem_limit = int(max(32 << 20, min(int(0.85 * vmem_cap), 2 * footprint(TR))))

    # ---- input: channels-last, im2col along W (kw folded into channels), padded,
    #      overlapping row tiles.  One materialized pre-pass in the wrapper.
    xh = jnp.transpose(x, (0, 2, 3, 4, 1)).astype(cdtype)               # (N,D,H,W,Cin)
    xh = jnp.pad(xh, ((0, 0), (0, 0), (ph, ph), (pw, pw), (0, 0)))
    xc = jnp.concatenate([xh[:, :, :, j * dw:j * dw + Wo, :] for j in range(kw)],
                         axis=-1)                                       # (N,D,Hp2,Wo,K1)
    xc = jnp.pad(xc, ((0, 0), (0, 0), (0, Hrows - Hp2), (0, Wp - Wo), (0, 0)))
    xt = jnp.stack([xc[:, :, r * TR:r * TR + TR + halo] for r in range(T)], axis=2)
    xt = xt.reshape(N, D, T, t_in, K1)

    # depth grid: skip the leading padded frames that can be pre-zeroed in the ring
    dp_start = min(pt, dt * (kt - 1))
    d_steps = Dp - dp_start

    kernel = functools.partial(
        _fused_dual_conv_kernel, kh=kh, dh=dh, kt=kt, dt=dt, Wp=Wp, t_out=t_out,
        pt=pt, d_in=D, ring=ring, dp_start=dp_start, skip_w2=skip_time_conv)

    ring_scratch = (pltpu.VMEM((1, 8, 128), cdtype) if skip_time_conv
                    else pltpu.VMEM((ring, t_out, Cintp), cdtype))

    # advisory cost estimate, real (unpadded) dims
    flops = 2 * N * D * Ho * Wo * kh * kw * Cin * Cint
    if not skip_time_conv:
        flops += 2 * N * Do * Ho * Wo * kt * Cint * Cout
    bytes_accessed = int(N * Cin * D * H * W * esz + N * Cout * Do * Ho * Wo * osz
                         + (w1.size + (0 if skip_time_conv else w2.size)) * esz
                         + 4 * (Cint + Cout))

    def x_depth(g):                         # clamped real-frame index for this step
        return jnp.maximum(jnp.minimum(g + (dp_start - pt), D - 1), 0)

    def o_depth(g):                         # output depth (clamped before 1st output)
        return jnp.maximum(g + (dp_start - dt * (kt - 1)), 0)

    out = pl.pallas_call(
        kernel,
        out_shape=jax.ShapeDtypeStruct((N, Do, T, t_out, Coutp), out_dtype),
        grid=(N, T, d_steps),
        in_specs=[
            pl.BlockSpec((None, None, None, t_in, K1),
                         lambda n, t, g: (n, x_depth(g), t, 0, 0)),
            pl.BlockSpec((kh, K1, Cintp), lambda n, t, g: (0, 0, 0)),
            pl.BlockSpec((1, Cintp), lambda n, t, g: (0, 0)),
            pl.BlockSpec((kt, Cintp, Coutp), lambda n, t, g: (0, 0, 0)),
            pl.BlockSpec((1, Coutp), lambda n, t, g: (0, 0)),
        ],
        # NOTE: for the first dt*(kt-1)-dp_start steps per (n, row-tile) the output
        # index is clamped to 0 and o_ref is not written; this relies on the depth
        # axis staying the innermost, sequential ("arbitrary") axis so the block is
        # fully written before its index changes.  Keep depth innermost.
        out_specs=pl.BlockSpec((None, None, None, t_out, Coutp),
                               lambda n, t, g: (n, o_depth(g), t, 0, 0)),
        scratch_shapes=[ring_scratch],
        compiler_params=pltpu.CompilerParams(
            dimension_semantics=("parallel", "parallel", "arbitrary"),
            vmem_limit_bytes=vmem_limit),
        cost_estimate=pl.CostEstimate(flops=flops, transcendentals=0,
                                      bytes_accessed=bytes_accessed),
    )(xt, w1h, b1h, w2h, b2h)

    # strip row-tile / lane padding and return NCDHW
    out = out.reshape(N, Do, T * TR, Wp, Coutp)[:, :, :Ho, :Wo, :Cout]
    return jnp.transpose(out, (0, 4, 1, 2, 3))


if __name__ == "__main__":
    key = jax.random.PRNGKey(0)
    N, Cin, Cout, D, H, W = 2, 4, 8, 8, 16, 16
    kt, kh, kw = 3, 3, 3
    padding = (1, 1, 1)
    dilation = (1, 1, 1)
    groups = 1
    Cint = Cout if Cin < Cout else Cin        # intermediate_channels from __init__

    # deterministic parameter init mimicking reset_parameters()
    fan_in1 = (Cin // groups) * 1 * kh * kw
    fan_in2 = (Cint // groups) * kt * 1 * 1
    wb1, wb2 = math.sqrt(1.0 / fan_in1), math.sqrt(1.0 / fan_in2)
    bb1, bb2 = 1.0 / math.sqrt(fan_in1), 1.0 / math.sqrt(fan_in2)
    k1, k2, k3, k4, k5 = jax.random.split(key, 5)
    w1 = jax.random.uniform(k1, (Cint, Cin // groups, 1, kh, kw), jnp.float32, -wb1, wb1)
    b1 = jax.random.uniform(k2, (Cint,), jnp.float32, -bb1, bb1)
    w2 = jax.random.uniform(k3, (Cout, Cint // groups, kt, 1, 1), jnp.float32, -wb2, wb2)
    b2 = jax.random.uniform(k4, (Cout,), jnp.float32, -bb2, bb2)
    x = jax.random.normal(k5, (N, Cin, D, H, W), jnp.float32)

    def xla_ref(x, w1, b1, w2, b2, padding, dilation, skip_time_conv=False):
        y = lax.conv_general_dilated(
            x, w1, (1, 1, 1),
            [(0, 0), (padding[1], padding[1]), (padding[2], padding[2])],
            rhs_dilation=(1, dilation[1], dilation[2]),
            dimension_numbers=("NCDHW", "OIDHW", "NCDHW")) + b1[None, :, None, None, None]
        if skip_time_conv:
            return y
        return lax.conv_general_dilated(
            y, w2, (1, 1, 1),
            [(padding[0], padding[0]), (0, 0), (0, 0)],
            rhs_dilation=(dilation[0], 1, 1),
            dimension_numbers=("NCDHW", "OIDHW", "NCDHW")) + b2[None, :, None, None, None]

    fwd = functools.partial(dual_conv3d_forward, stride=(1, 1, 1), padding=padding,
                            dilation=dilation, groups=groups)
    ref = xla_ref(x, w1, b1, w2, b2, padding, dilation)

    # 1) fused f32, small row tile (exercises the halo / multi-tile path)
    out = jax.block_until_ready(fwd(x, w1, b1, w2, b2, row_tile=8))
    assert out.shape == ref.shape, (out.shape, ref.shape)
    np.testing.assert_allclose(np.asarray(out), np.asarray(ref), rtol=1e-4, atol=1e-4)

    # 2) default (VMEM-derived) row tile
    out_d = jax.block_until_ready(fwd(x, w1, b1, w2, b2))
    np.testing.assert_allclose(np.asarray(out_d), np.asarray(ref), rtol=1e-4, atol=1e-4)

    # 3) spatial-only path (skip_time_conv bypasses the temporal matmul entirely)
    ref_s = xla_ref(x, w1, b1, w2, b2, padding, dilation, skip_time_conv=True)
    out_s = jax.block_until_ready(fwd(x, w1, b1, w2, b2, skip_time_conv=True, row_tile=8))
    assert out_s.shape == ref_s.shape, (out_s.shape, ref_s.shape)
    np.testing.assert_allclose(np.asarray(out_s), np.asarray(ref_s), rtol=1e-4, atol=1e-4)

    # 4) bf16 MXU operands, f32 accumulation (loose tolerance vs. f32 reference)
    out_bf = jax.block_until_ready(fwd(x, w1, b1, w2, b2, row_tile=8,
                                       mxu_dtype=jnp.bfloat16))
    np.testing.assert_allclose(np.asarray(out_bf), np.asarray(ref), rtol=5e-2, atol=5e-2)

    # 5) dilated + larger temporal padding (exercises ring pre-zero + index clamps)
    pad2, dil2 = (2, 2, 2), (2, 2, 2)
    ref2 = xla_ref(x, w1, b1, w2, b2, pad2, dil2)
    out2 = jax.block_until_ready(
        dual_conv3d_forward(x, w1, b1, w2, b2, stride=(1, 1, 1), padding=pad2,
                            dilation=dil2, groups=groups, row_tile=8))
    assert out2.shape == ref2.shape, (out2.shape, ref2.shape)
    np.testing.assert_allclose(np.asarray(out2), np.asarray(ref2), rtol=1e-4, atol=1e-4)

    print("KERNEL_OK")
</pallas_src>

<mosaic_0001>
module attributes {stable_mosaic.version = 11 : i64} {
  func.func @_fused_dual_conv_kernel(%arg0: i32, %arg1: i32, %arg2: i32, %arg3: memref<1x1x1x160x12xf32, #tpu.memory_space<vmem>>, %arg4: memref<3x12x128xf32, #tpu.memory_space<vmem>>, %arg5: memref<1x128xf32, #tpu.memory_space<vmem>>, %arg6: memref<3x128x128xf32, #tpu.memory_space<vmem>>, %arg7: memref<1x128xf32, #tpu.memory_space<vmem>>, %arg8: memref<1x1x1x128x128xf32, #tpu.memory_space<vmem>>, %arg9: memref<3x128x128xf32, #tpu.memory_space<vmem>>) attributes {dimension_semantics = [#tpu.dimension_semantics<parallel>, #tpu.dimension_semantics<parallel>, #tpu.dimension_semantics<arbitrary>], iteration_bounds = array<i64: 2, 2, 9>, scalar_prefetch = 0 : i64, scratch_operands = 1 : i64, tpu.core_type = #tpu.core_type<tc>, window_params = [{transform_indices = @transform_0, window_bounds = array<i64: 1, 1, 1, 160, 12>}, {pipeline_mode = #tpu.pipeline_mode<synchronous>, transform_indices = @transform_1, window_bounds = array<i64: 3, 12, 128>}, {pipeline_mode = #tpu.pipeline_mode<synchronous>, transform_indices = @transform_2, window_bounds = array<i64: 1, 128>}, {pipeline_mode = #tpu.pipeline_mode<synchronous>, transform_indices = @transform_3, window_bounds = array<i64: 3, 128, 128>}, {pipeline_mode = #tpu.pipeline_mode<synchronous>, transform_indices = @transform_4, window_bounds = array<i64: 1, 128>}, {transform_indices = @transform_5, window_bounds = array<i64: 1, 1, 1, 128, 128>}]} {
    %c1_i32 = arith.constant 1 : i32
    %0 = arith.addi %arg2, %c1_i32 : i32
    %cst = arith.constant 0.000000e+00 : f32
    %1 = vector.broadcast %cst : f32 to vector<128x128xf32>
    %c0 = arith.constant 0 : index
    %c0_0 = arith.constant 0 : index
    %c0_1 = arith.constant 0 : index
    %c0_2 = arith.constant 0 : index
    %c0_3 = arith.constant 0 : index
    %2 = vector.load %arg3[%c0, %c0_0, %c0_1, %c0_2, %c0_3] : memref<1x1x1x160x12xf32, #tpu.memory_space<vmem>>, vector<1x1x1x128x12xf32>
    %3 = vector.shape_cast %2 : vector<1x1x1x128x12xf32> to vector<128x12xf32>
    %c0_4 = arith.constant 0 : index
    %c0_5 = arith.constant 0 : index
    %c0_6 = arith.constant 0 : index
    %4 = vector.load %arg4[%c0_4, %c0_5, %c0_6] : memref<3x12x128xf32, #tpu.memory_space<vmem>>, vector<1x12x128xf32>
    %5 = vector.shape_cast %4 : vector<1x12x128xf32> to vector<12x128xf32>
    %cst_7 = arith.constant dense<0.000000e+00> : vector<128x128xf32>
    %6 = tpu.matmul %3, %5, %cst_7 {dimension_numbers = #tpu.dot_dimension_numbers<[1], [0], [0], [1], [0, 0, 1, 1], [], []>} : vector<128x12xf32>, vector<12x128xf32>, vector<128x128xf32> -> vector<128x128xf32>
    %7 = arith.addf %1, %6 : vector<128x128xf32>
    %c0_8 = arith.constant 0 : index
    %c0_9 = arith.constant 0 : index
    %c0_10 = arith.constant 0 : index
    %c16 = arith.constant 16 : index
    %c0_11 = arith.constant 0 : index
    %8 = vector.load %arg3[%c0_8, %c0_9, %c0_10, %c16, %c0_11] : memref<1x1x1x160x12xf32, #tpu.memory_space<vmem>>, vector<1x1x1x128x12xf32>
    %9 = vector.shape_cast %8 : vector<1x1x1x128x12xf32> to vector<128x12xf32>
    %c1 = arith.constant 1 : index
    %c0_12 = arith.constant 0 : index
    %c0_13 = arith.constant 0 : index
    %10 = vector.load %arg4[%c1, %c0_12, %c0_13] : memref<3x12x128xf32, #tpu.memory_space<vmem>>, vector<1x12x128xf32>
    %11 = vector.shape_cast %10 : vector<1x12x128xf32> to vector<12x128xf32>
    %cst_14 = arith.constant dense<0.000000e+00> : vector<128x128xf32>
    %12 = tpu.matmul %9, %11, %cst_14 {dimension_numbers = #tpu.dot_dimension_numbers<[1], [0], [0], [1], [0, 0, 1, 1], [], []>} : vector<128x12xf32>, vector<12x128xf32>, vector<128x128xf32> -> vector<128x128xf32>
    %13 = arith.addf %7, %12 : vector<128x128xf32>
    %c0_15 = arith.constant 0 : index
    %c0_16 = arith.constant 0 : index
    %c0_17 = arith.constant 0 : index
    %c32 = arith.constant 32 : index
    %c0_18 = arith.constant 0 : index
    %14 = vector.load %arg3[%c0_15, %c0_16, %c0_17, %c32, %c0_18] : memref<1x1x1x160x12xf32, #tpu.memory_space<vmem>>, vector<1x1x1x128x12xf32>
    %15 = vector.shape_cast %14 : vector<1x1x1x128x12xf32> to vector<128x12xf32>
    %c2 = arith.constant 2 : index
    %c0_19 = arith.constant 0 : index
    %c0_20 = arith.constant 0 : index
    %16 = vector.load %arg4[%c2, %c0_19, %c0_20] : memref<3x12x128xf32, #tpu.memory_space<vmem>>, vector<1x12x128xf32>
    %17 = vector.shape_cast %16 : vector<1x12x128xf32> to vector<12x128xf32>
    %cst_21 = arith.constant dense<0.000000e+00> : vector<128x128xf32>
    %18 = tpu.matmul %15, %17, %cst_21 {dimension_numbers = #tpu.dot_dimension_numbers<[1], [0], [0], [1], [0, 0, 1, 1], [], []>} : vector<128x12xf32>, vector<12x128xf32>, vector<128x128xf32> -> vector<128x128xf32>
    %19 = arith.addf %13, %18 : vector<128x128xf32>
    %c0_22 = arith.constant 0 : index
    %c0_23 = arith.constant 0 : index
    %20 = vector.load %arg5[%c0_22, %c0_23] : memref<1x128xf32, #tpu.memory_space<vmem>>, vector<1x128xf32>
    %21 = vector.broadcast %20 : vector<1x128xf32> to vector<128x128xf32>
    %22 = arith.addf %19, %21 : vector<128x128xf32>
    %c1_i32_24 = arith.constant 1 : i32
    %23 = arith.cmpi sge, %0, %c1_i32_24 : i32
    %c9_i32 = arith.constant 9 : i32
    %24 = arith.cmpi slt, %0, %c9_i32 : i32
    %25 = arith.andi %23, %24 : i1
    %cst_25 = arith.constant 0.000000e+00 : f32
    %26 = vector.broadcast %cst_25 : f32 to vector<128x128xf32>
    %27 = arith.select %25, %22, %26 : vector<128x128xf32>
    %c0_i32 = arith.constant 0 : i32
    %28 = arith.cmpi eq, %arg2, %c0_i32 : i32
    %29 = arith.extui %28 : i1 to i32
    %c0_i32_26 = arith.constant 0 : i32
    %30 = arith.cmpi ne, %29, %c0_i32_26 : i32
    scf.if %30 {
      %cst_35 = arith.constant 0.000000e+00 : f32
      %48 = vector.broadcast %cst_35 : f32 to vector<128x128xf32>
      %c0_36 = arith.constant 0 : index
      %c0_37 = arith.constant 0 : index
      %c0_38 = arith.constant 0 : index
      %49 = vector.load %arg9[%c0_36, %c0_37, %c0_38] : memref<3x128x128xf32, #tpu.memory_space<vmem>>, vector<1x128x128xf32>
      %50 = vector.shape_cast %49 : vector<1x128x128xf32> to vector<128x128xf32>
      %51 = vector.shape_cast %48 : vector<128x128xf32> to vector<1x128x128xf32>
      tpu.vector_store %arg9[%c0_36, %c0_37, %c0_38], %51 {strides = array<i32>} : memref<3x128x128xf32, #tpu.memory_space<vmem>>, vector<1x128x128xf32>,
    } else {
    }
    %c3_i32 = arith.constant 3 : i32
    %c0_i32_27 = arith.constant 0 : i32
    %31 = arith.cmpi eq, %c3_i32, %c0_i32_27 : i32
    %c1_i32_28 = arith.constant 1 : i32
    %32 = arith.select %31, %c1_i32_28, %c3_i32 : i32
    %33 = arith.remsi %0, %32 : i32
    %c0_i32_29 = arith.constant 0 : i32
    %34 = arith.cmpi ne, %33, %c0_i32_29 : i32
    %c0_i32_30 = arith.constant 0 : i32
    %35 = arith.cmpi slt, %33, %c0_i32_30 : i32
    %c0_i32_31 = arith.constant 0 : i32
    %36 = arith.cmpi slt, %32, %c0_i32_31 : i32
    %37 = arith.xori %35, %36 : i1
    %38 = arith.andi %37, %34 : i1
    %39 = arith.addi %33, %32 : i32
    %40 = arith.select %38, %39, %33 : i32
    %41 = arith.index_cast %40 : i32 to index
    %c0_32 = arith.constant 0 : index
    %c0_33 = arith.constant 0 : index
    %42 = vector.load %arg9[%41, %c0_32, %c0_33] : memref<3x128x128xf32, #tpu.memory_space<vmem>>, vector<1x128x128xf32>
    %43 = vector.shape_cast %42 : vector<1x128x128xf32> to vector<128x128xf32>
    %44 = vector.shape_cast %27 : vector<128x128xf32> to vector<1x128x128xf32>
    tpu.vector_store %arg9[%41, %c0_32, %c0_33], %44 {strides = array<i32>} : memref<3x128x128xf32, #tpu.memory_space<vmem>>, vector<1x128x128xf32>,
    %c2_i32 = arith.constant 2 : i32
    %45 = arith.cmpi sge, %0, %c2_i32 : i32
    %46 = arith.extui %45 : i1 to i32
    %c0_i32_34 = arith.constant 0 : i32
    %47 = arith.cmpi ne, %46, %c0_i32_34 : i32
    scf.if %47 {
      %c2_i32_35 = arith.constant 2 : i32
      %48 = arith.subi %0, %c2_i32_35 : i32
      %c2_36 = arith.constant 2 : index
      %c0_37 = arith.constant 0 : index
      %c0_38 = arith.constant 0 : index
      %49 = vector.load %arg6[%c2_36, %c0_37, %c0_38] : memref<3x128x128xf32, #tpu.memory_space<vmem>>, vector<1x128x128xf32>
      %50 = vector.shape_cast %49 : vector<1x128x128xf32> to vector<128x128xf32>
      %cst_39 = arith.constant dense<0.000000e+00> : vector<128x128xf32>
      %51 = tpu.matmul %27, %50, %cst_39 {dimension_numbers = #tpu.dot_dimension_numbers<[1], [0], [0], [1], [0, 0, 1, 1], [], []>} : vector<128x128xf32>, vector<128x128xf32>, vector<128x128xf32> -> vector<128x128xf32>
      %c0_i32_40 = arith.constant 0 : i32
      %52 = arith.addi %48, %c0_i32_40 : i32
      %c3_i32_41 = arith.constant 3 : i32
      %c0_i32_42 = arith.constant 0 : i32
      %53 = arith.cmpi eq, %c3_i32_41, %c0_i32_42 : i32
      %c1_i32_43 = arith.constant 1 : i32
      %54 = arith.select %53, %c1_i32_43, %c3_i32_41 : i32
      %55 = arith.remsi %52, %54 : i32
      %c0_i32_44 = arith.constant 0 : i32
      %56 = arith.cmpi ne, %55, %c0_i32_44 : i32
      %c0_i32_45 = arith.constant 0 : i32
      %57 = arith.cmpi slt, %55, %c0_i32_45 : i32
      %c0_i32_46 = arith.constant 0 : i32
      %58 = arith.cmpi slt, %54, %c0_i32_46 : i32
      %59 = arith.xori %57, %58 : i1
      %60 = arith.andi %59, %56 : i1
      %61 = arith.addi %55, %54 : i32
      %62 = arith.select %60, %61, %55 : i32
      %63 = arith.index_cast %62 : i32 to index
      %c0_47 = arith.constant 0 : index
      %c0_48 = arith.constant 0 : index
      %64 = vector.load %arg9[%63, %c0_47, %c0_48] : memref<3x128x128xf32, #tpu.memory_space<vmem>>, vector<1x128x128xf32>
      %65 = vector.shape_cast %64 : vector<1x128x128xf32> to vector<128x128xf32>
      %c0_49 = arith.constant 0 : index
      %c0_50 = arith.constant 0 : index
      %c0_51 = arith.constant 0 : index
      %66 = vector.load %arg6[%c0_49, %c0_50, %c0_51] : memref<3x128x128xf32, #tpu.memory_space<vmem>>, vector<1x128x128xf32>
      %67 = vector.shape_cast %66 : vector<1x128x128xf32> to vector<128x128xf32>
      %cst_52 = arith.constant dense<0.000000e+00> : vector<128x128xf32>
      %68 = tpu.matmul %65, %67, %cst_52 {dimension_numbers = #tpu.dot_dimension_numbers<[1], [0], [0], [1], [0, 0, 1, 1], [], []>} : vector<128x128xf32>, vector<128x128xf32>, vector<128x128xf32> -> vector<128x128xf32>
      %69 = arith.addf %51, %68 : vector<128x128xf32>
      %c1_i32_53 = arith.constant 1 : i32
      %70 = arith.addi %48, %c1_i32_53 : i32
      %c3_i32_54 = arith.constant 3 : i32
      %c0_i32_55 = arith.constant 0 : i32
      %71 = arith.cmpi eq, %c3_i32_54, %c0_i32_55 : i32
      %c1_i32_56 = arith.constant 1 : i32
      %72 = arith.select %71, %c1_i32_56, %c3_i32_54 : i32
      %73 = arith.remsi %70, %72 : i32
      %c0_i32_57 = arith.constant 0 : i32
      %74 = arith.cmpi ne, %73, %c0_i32_57 : i32
      %c0_i32_58 = arith.constant 0 : i32
      %75 = arith.cmpi slt, %73, %c0_i32_58 : i32
      %c0_i32_59 = arith.constant 0 : i32
      %76 = arith.cmpi slt, %72, %c0_i32_59 : i32
      %77 = arith.xori %75, %76 : i1
      %78 = arith.andi %77, %74 : i1
      %79 = arith.addi %73, %72 : i32
      %80 = arith.select %78, %79, %73 : i32
      %81 = arith.index_cast %80 : i32 to index
      %c0_60 = arith.constant 0 : index
      %c0_61 = arith.constant 0 : index
      %82 = vector.load %arg9[%81, %c0_60, %c0_61] : memref<3x128x128xf32, #tpu.memory_space<vmem>>, vector<1x128x128xf32>
      %83 = vector.shape_cast %82 : vector<1x128x128xf32> to vector<128x128xf32>
      %c1_62 = arith.constant 1 : index
      %c0_63 = arith.constant 0 : index
      %c0_64 = arith.constant 0 : index
      %84 = vector.load %arg6[%c1_62, %c0_63, %c0_64] : memref<3x128x128xf32, #tpu.memory_space<vmem>>, vector<1x128x128xf32>
      %85 = vector.shape_cast %84 : vector<1x128x128xf32> to vector<128x128xf32>
      %cst_65 = arith.constant dense<0.000000e+00> : vector<128x128xf32>
      %86 = tpu.matmul %83, %85, %cst_65 {dimension_numbers = #tpu.dot_dimension_numbers<[1], [0], [0], [1], [0, 0, 1, 1], [], []>} : vector<128x128xf32>, vector<128x128xf32>, vector<128x128xf32> -> vector<128x128xf32>
      %87 = arith.addf %69, %86 : vector<128x128xf32>
      %c0_66 = arith.constant 0 : index
      %c0_67 = arith.constant 0 : index
      %88 = vector.load %arg7[%c0_66, %c0_67] : memref<1x128xf32, #tpu.memory_space<vmem>>, vector<1x128xf32>
      %89 = vector.broadcast %88 : vector<1x128xf32> to vector<128x128xf32>
      %90 = arith.addf %87, %89 : vector<128x128xf32>
      %c0_68 = arith.constant 0 : index
      %c0_69 = arith.constant 0 : index
      %c0_70 = arith.constant 0 : index
      %c0_71 = arith.constant 0 : index
      %c0_72 = arith.constant 0 : index
      %91 = vector.load %arg8[%c0_68, %c0_69, %c0_70, %c0_71, %c0_72] : memref<1x1x1x128x128xf32, #tpu.memory_space<vmem>>, vector<1x1x1x128x128xf32>
      %92 = vector.shape_cast %91 : vector<1x1x1x128x128xf32> to vector<128x128xf32>
      %93 = vector.shape_cast %90 : vector<128x128xf32> to vector<1x1x1x128x128xf32>
      tpu.vector_store %arg8[%c0_68, %c0_69, %c0_70, %c0_71, %c0_72], %93 {strides = array<i32>} : memref<1x1x1x128x128xf32, #tpu.memory_space<vmem>>, vector<1x1x1x128x128xf32>,
    } else {
    }
    return
  }
  func.func @transform_0(%arg0: i32, %arg1: i32, %arg2: i32) -> (i32, i32, i32, i32, i32) {
    %c0_i32 = arith.constant 0 : i32
    %0 = arith.addi %arg2, %c0_i32 : i32
    %c7_i32 = arith.constant 7 : i32
    %1 = arith.minsi %0, %c7_i32 : i32
    %c0_i32_0 = arith.constant 0 : i32
    %2 = arith.maxsi %1, %c0_i32_0 : i32
    %c0_i32_1 = arith.constant 0 : i32
    %c0_i32_2 = arith.constant 0 : i32
    %c0_i32_3 = arith.constant 0 : i32
    return %arg0, %2, %arg1, %c0_i32_1, %c0_i32_2 : i32, i32, i32, i32, i32
  }
  func.func @transform_1(%arg0: i32, %arg1: i32, %arg2: i32) -> (i32, i32, i32) {
    %c0_i32 = arith.constant 0 : i32
    %c0_i32_0 = arith.constant 0 : i32
    %c0_i32_1 = arith.constant 0 : i32
    %c0_i32_2 = arith.constant 0 : i32
    return %c0_i32, %c0_i32_0, %c0_i32_1 : i32, i32, i32
  }
  func.func @transform_2(%arg0: i32, %arg1: i32, %arg2: i32) -> (i32, i32) {
    %c0_i32 = arith.constant 0 : i32
    %c0_i32_0 = arith.constant 0 : i32
    %c0_i32_1 = arith.constant 0 : i32
    return %c0_i32, %c0_i32_0 : i32, i32
  }
  func.func @transform_3(%arg0: i32, %arg1: i32, %arg2: i32) -> (i32, i32, i32) {
    %c0_i32 = arith.constant 0 : i32
    %c0_i32_0 = arith.constant 0 : i32
    %c0_i32_1 = arith.constant 0 : i32
    %c0_i32_2 = arith.constant 0 : i32
    return %c0_i32, %c0_i32_0, %c0_i32_1 : i32, i32, i32
  }
  func.func @transform_4(%arg0: i32, %arg1: i32, %arg2: i32) -> (i32, i32) {
    %c0_i32 = arith.constant 0 : i32
    %c0_i32_0 = arith.constant 0 : i32
    %c0_i32_1 = arith.constant 0 : i32
    return %c0_i32, %c0_i32_0 : i32, i32
  }
  func.func @transform_5(%arg0: i32, %arg1: i32, %arg2: i32) -> (i32, i32, i32, i32, i32) {
    %c-1_i32 = arith.constant -1 : i32
    %0 = arith.addi %arg2, %c-1_i32 : i32
    %c0_i32 = arith.constant 0 : i32
    %1 = arith.maxsi %0, %c0_i32 : i32
    %c0_i32_0 = arith.constant 0 : i32
    %c0_i32_1 = arith.constant 0 : i32
    %c0_i32_2 = arith.constant 0 : i32
    return %arg0, %1, %arg1, %c0_i32_0, %c0_i32_1 : i32, i32, i32, i32, i32
  }
}

</mosaic_0001>

<llo_original>
// kernel: tpu_custom_call.1
$region0: #{tpu_custom_call.1}
  #allocation0 [shape = 'u32[]', space=smem, size = 0x4, offset = 0x4, fixed_abs, tag = 'smem constant byte address 0x4 - core index']
  #allocation1 [shape = 'u32[144,128]{1,0:T(1,128)}', space=vmem, size = 0x12000, scoped, tag = 'internal scratch']
  #allocation2 [shape = 'f32[3,128,128]{2,1,0:T(8,128)}', space=vmem, size = 0x30000, scoped, tag = 'scratch operand']
  %s0 = inlined_call_operand.vmem [shape: f32[2,8,2,160,12], index: 0, kind: input, shape index: {}]
  %s1 = inlined_call_operand.vmem [shape: f32[3,12,128], index: 1, kind: input, shape index: {}]
  %s2 = inlined_call_operand.vmem [shape: f32[1,128], index: 2, kind: input, shape index: {}]
  %s3 = inlined_call_operand.vmem [shape: f32[3,128,128], index: 3, kind: input, shape index: {}]
  %s4 = inlined_call_operand.vmem [shape: f32[1,128], index: 4, kind: input, shape index: {}]
  %s5 = inlined_call_operand.hbm [shape: f32[2,8,2,128,128], index: 5, kind: output, shape index: {}]
  %s6 = sld [smem:[#allocation0]]
  $region61: #{tpu_custom_call.1} parent=0
    _
  %s8 = ssub.s32 1, %s6
  %s9 = scalar_select 0, %s8, %s6
  $region1: #{tpu_custom_call.1} parent=0
    #allocation3 [shape = 'u8[131072]{0}', space=vmem, size = 0x20000, scoped, tag = 'output window, operand 0']
    #allocation4 [shape = 's32[2]{0}', space=sflag, size = 0x8, scoped, tag = 'scoped memory for tpu_custom_call.1']
    %10 = vsyncpa [#allocation4], 0
    %s11 = scalar_lea.sflag [#allocation4], 1
    %12 = vsyncpa %s11, 0
    loop: start=0, step=1, limit=38
    $region2: #{tpu_custom_call.1} parent=1 // loop_pre_header
      _
    $region3: #{tpu_custom_call.1} parent=1 // loop_header
      %s14 = sphi 0, %s18
      %p15 = scmp.ge.s32.totalorder %s14, 38
      %s21 = sphi 0, %s40
      %s22 = sphi 0, %s36
      %s23 = sphi 0, %s32
      %s24 = sphi 0, %s21
      %s25 = sphi 0, %s22
      %s26 = sphi 0, %s23
      %s27 = sphi 0, %s24
      %s28 = sphi 0, %s25
      %s29 = sphi 0, %s26
      %s55 = sphi 0, %s57
      %s58 = sphi 0, %s55
      %s59 = sphi 0, %s58
      %s75 = sphi 0, %s59
      %s79 = sphi 0, %s79
      %s81 = sphi 0, %s79
      %s82 = sphi 0, %s81
      %s96 = sphi 0, %s82
      %s100 = sphi 0, %s100
      %s102 = sphi 0, %s100
      %s103 = sphi 0, %s102
      %s117 = sphi 0, %s103
      %s121 = sphi 0, %s121
      %s123 = sphi 0, %s121
      %s124 = sphi 0, %s123
      %s138 = sphi 0, %s124
      %s142 = sphi 0, %s142
      %s144 = sphi 0, %s142
      %s145 = sphi 0, %s144
      %s159 = sphi 0, %s145
      %s175 = sphi 0, %s177
      %s178 = sphi 0, %s175
      %s179 = sphi 0, %s178
      %s195 = sphi 0, %s179
    $region4: #{tpu_custom_call.1} parent=1 // loop_header_branch
      %17 = sbr.rel (%p15) target = $region8
    $region5: #{tpu_custom_call.1} parent=1 // loop_body
      %s19 = ssub.s32 %s14, 1
      %s20 = ssub.s32 %s14, 2
      %s30 = sadd.s32 1, %s23
      %p31 = scmp.ge.s32.totalorder %s30, 9
      %s32 = scalar_select %p31, 0, %s30
      %s33 = sadd.s32 1, %s22
      %s34 = scalar_select %p31, %s33, %s22
      %p35 = scmp.ge.s32.totalorder %s34, 2
      %s36 = scalar_select %p35, 0, %s34
      %s37 = sadd.s32 1, %s21
      %s38 = scalar_select %p35, %s37, %s21
      %p39 = scmp.ge.s32.totalorder %s38, 2
      %s40 = scalar_select %p39, 0, %s38
      %p41 = scmp.lt.s32.totalorder %s23, 7
      %s42 = scalar_select %p41, %s23, 7
      %p43 = scmp.gt.s32.totalorder %s42, 0
      %s44 = scalar_select %p43, %s42, 0
      %p45 = scmp.lt.s32.totalorder %s32, 7
      %s46 = scalar_select %p45, %s32, 7
      %p47 = scmp.gt.s32.totalorder %s46, 0
      %s48 = scalar_select %p47, %s46, 0
      %s49 = ssub.s32 %s21, %s40
      %s50 = ssub.s32 %s44, %s48
      %s51 = sor.u32 %s49, %s50
      %s52 = ssub.s32 %s22, %s36
      %s53 = sor.u32 %s51, %s52
      %p54 = scmp.eq.s32.totalorder %s53, 0
      %s56 = sadd.s32 %s55, 1
      %s57 = scalar_select %p54, %s55, %s56
      %p60 = pneg %p54
      %p61 = scmp.eq.s32.totalorder %s14, 35
      %p62 = por %p60, %p61
      %p63 = scmp.ne.s32.totalorder %s55, %s58
      %p64 = scmp.eq.s32.totalorder %s14, 0
      %p65 = por %p63, %p64
      %p66 = scmp.ne.s32.totalorder %s55, %s58
      %p67 = scmp.eq.s32.totalorder %s19, 35
      %p68 = por %p66, %p67
      %p69 = scmp.ne.s32.totalorder %s58, %s59
      %p70 = scmp.eq.s32.totalorder %s19, 0
      %p71 = por %p69, %p70
      %p72 = scmp.ne.s32.totalorder %s58, %s59
      %p73 = scmp.eq.s32.totalorder %s20, 35
      %p74 = por %p72, %p73
      %p76 = scmp.ne.s32.totalorder %s59, %s75
      %p77 = scmp.eq.s32.totalorder %s20, 0
      %p78 = por %p76, %p77
      %s80 = sadd.s32 %s79, 1
      %p83 = scmp.eq.s32.totalorder %s14, 35
      %p84 = scmp.ne.s32.totalorder %s79, %s81
      %p85 = scmp.eq.s32.totalorder %s14, 0
      %p86 = por %p84, %p85
      %p87 = scmp.ne.s32.totalorder %s79, %s81
      %p88 = scmp.eq.s32.totalorder %s19, 35
      %p89 = por %p87, %p88
      %p90 = scmp.ne.s32.totalorder %s81, %s82
      %p91 = scmp.eq.s32.totalorder %s19, 0
      %p92 = por %p90, %p91
      %p93 = scmp.ne.s32.totalorder %s81, %s82
      %p94 = scmp.eq.s32.totalorder %s20, 35
      %p95 = por %p93, %p94
      %p97 = scmp.ne.s32.totalorder %s82, %s96
      %p98 = scmp.eq.s32.totalorder %s20, 0
      %p99 = por %p97, %p98
      %s101 = sadd.s32 %s100, 1
      %p104 = scmp.eq.s32.totalorder %s14, 35
      %p105 = scmp.ne.s32.totalorder %s100, %s102
      %p106 = scmp.eq.s32.totalorder %s14, 0
      %p107 = por %p105, %p106
      %p108 = scmp.ne.s32.totalorder %s100, %s102
      %p109 = scmp.eq.s32.totalorder %s19, 35
      %p110 = por %p108, %p109
      %p111 = scmp.ne.s32.totalorder %s102, %s103
      %p112 = scmp.eq.s32.totalorder %s19, 0
      %p113 = por %p111, %p112
      %p114 = scmp.ne.s32.totalorder %s102, %s103
      %p115 = scmp.eq.s32.totalorder %s20, 35
      %p116 = por %p114, %p115
      %p118 = scmp.ne.s32.totalorder %s103, %s117
      %p119 = scmp.eq.s32.totalorder %s20, 0
      %p120 = por %p118, %p119
      %s122 = sadd.s32 %s121, 1
      %p125 = scmp.eq.s32.totalorder %s14, 35
      %p126 = scmp.ne.s32.totalorder %s121, %s123
      %p127 = scmp.eq.s32.totalorder %s14, 0
      %p128 = por %p126, %p127
      %p129 = scmp.ne.s32.totalorder %s121, %s123
      %p130 = scmp.eq.s32.totalorder %s19, 35
      %p131 = por %p129, %p130
      %p132 = scmp.ne.s32.totalorder %s123, %s124
      %p133 = scmp.eq.s32.totalorder %s19, 0
      %p134 = por %p132, %p133
      %p135 = scmp.ne.s32.totalorder %s123, %s124
      %p136 = scmp.eq.s32.totalorder %s20, 35
      %p137 = por %p135, %p136
      %p139 = scmp.ne.s32.totalorder %s124, %s138
      %p140 = scmp.eq.s32.totalorder %s20, 0
      %p141 = por %p139, %p140
      %s143 = sadd.s32 %s142, 1
      %p146 = scmp.eq.s32.totalorder %s14, 35
      %p147 = scmp.ne.s32.totalorder %s142, %s144
      %p148 = scmp.eq.s32.totalorder %s14, 0
      %p149 = por %p147, %p148
      %p150 = scmp.ne.s32.totalorder %s142, %s144
      %p151 = scmp.eq.s32.totalorder %s19, 35
      %p152 = por %p150, %p151
      %p153 = scmp.ne.s32.totalorder %s144, %s145
      %p154 = scmp.eq.s32.totalorder %s19, 0
      %p155 = por %p153, %p154
      %p156 = scmp.ne.s32.totalorder %s144, %s145
      %p157 = scmp.eq.s32.totalorder %s20, 35
      %p158 = por %p156, %p157
      %p160 = scmp.ne.s32.totalorder %s145, %s159
      %p161 = scmp.eq.s32.totalorder %s20, 0
      %p162 = por %p160, %p161
      %s163 = sadd.s32 %s23, 4294967295
      %p164 = scmp.gt.s32.totalorder %s163, 0
      %s165 = scalar_select %p164, %s163, 0
      %s166 = sadd.s32 %s32, 4294967295
      %p167 = scmp.gt.s32.totalorder %s166, 0
      %s168 = scalar_select %p167, %s166, 0
      %s169 = ssub.s32 %s21, %s40
      %s170 = ssub.s32 %s165, %s168
      %s171 = sor.u32 %s169, %s170
      %s172 = ssub.s32 %s22, %s36
      %s173 = sor.u32 %s171, %s172
      %p174 = scmp.eq.s32.totalorder %s173, 0
      %s176 = sadd.s32 %s175, 1
      %s177 = scalar_select %p174, %s175, %s176
      %p180 = pneg %p174
      %p181 = scmp.eq.s32.totalorder %s14, 35
      %p182 = por %p180, %p181
      %p183 = scmp.ne.s32.totalorder %s175, %s178
      %p184 = scmp.eq.s32.totalorder %s14, 0
      %p185 = por %p183, %p184
      %p186 = scmp.ne.s32.totalorder %s175, %s178
      %p187 = scmp.eq.s32.totalorder %s19, 35
      %p188 = por %p186, %p187
      %p189 = scmp.ne.s32.totalorder %s178, %s179
      %p190 = scmp.eq.s32.totalorder %s19, 0
      %p191 = por %p189, %p190
      %p192 = scmp.ne.s32.totalorder %s178, %s179
      %p193 = scmp.eq.s32.totalorder %s20, 35
      %p194 = por %p192, %p193
      %p196 = scmp.ne.s32.totalorder %s179, %s195
      %p197 = scmp.eq.s32.totalorder %s20, 0
      %p198 = por %p196, %p197
      %p199 = scmp.le.s32.totalorder 1, %s14
      %p200 = scmp.lt.s32.totalorder %s14, 37
      %p201 = pnand %p199, %p200
      %p202 = pneg %p201
      // Predicated region
      $region9: #{tpu_custom_call.1} parent=5 // pred_check
        _
      $region10: #{tpu_custom_call.1} parent=5 // pred_check_branch
        %204 = sbr.rel (%p201) target = $region12
      $region11: #{tpu_custom_call.1} parent=5 // pred_region
        %s205 = ssub.s32 %s14, 1
        // Predicated region
        $region13: #{tpu_custom_call.1} parent=11 // pred_check
          %p206 = pneg %p92
        $region14: #{tpu_custom_call.1} parent=11 // pred_check_branch
          %208 = sbr.rel (%p206) target = $region16
        $region15: #{tpu_custom_call.1} parent=11 // pred_region
          _
        $region16: #{tpu_custom_call.1} parent=11 // pred_fallthru
          _
        // Predicated region
        $region17: #{tpu_custom_call.1} parent=11 // pred_check
          %p209 = pneg %p113
        $region18: #{tpu_custom_call.1} parent=11 // pred_check_branch
          %211 = sbr.rel (%p209) target = $region20
        $region19: #{tpu_custom_call.1} parent=11 // pred_region
          _
        $region20: #{tpu_custom_call.1} parent=11 // pred_fallthru
          _
        // Predicated region
        $region21: #{tpu_custom_call.1} parent=11 // pred_check
          %p212 = pneg %p134
        $region22: #{tpu_custom_call.1} parent=11 // pred_check_branch
          %214 = sbr.rel (%p212) target = $region24
        $region23: #{tpu_custom_call.1} parent=11 // pred_region
          _
        $region24: #{tpu_custom_call.1} parent=11 // pred_fallthru
          _
        // Predicated region
        $region25: #{tpu_custom_call.1} parent=11 // pred_check
          %p215 = pneg %p155
        $region26: #{tpu_custom_call.1} parent=11 // pred_check_branch
          %217 = sbr.rel (%p215) target = $region28
        $region27: #{tpu_custom_call.1} parent=11 // pred_region
          _
        $region28: #{tpu_custom_call.1} parent=11 // pred_fallthru
          _
      $region12: #{tpu_custom_call.1} parent=5 // pred_fallthru
        _
      %p218 = scmp.lt.s32.totalorder %s14, 36
      // Predicated region
      $region29: #{tpu_custom_call.1} parent=5 // pred_check
        %p219 = pneg %p218
      $region30: #{tpu_custom_call.1} parent=5 // pred_check_branch
        %221 = sbr.rel (%p219) target = $region32
      $region31: #{tpu_custom_call.1} parent=5 // pred_region
        // Predicated region
        $region33: #{tpu_custom_call.1} parent=31 // pred_check
          %p222 = pneg %p65
        $region34: #{tpu_custom_call.1} parent=31 // pred_check_branch
          %224 = sbr.rel (%p222) target = $region36
        $region35: #{tpu_custom_call.1} parent=31 // pred_region
          %p225 = scmp.lt.s32.totalorder %s23, 7
          %s226 = scalar_select %p225, %s23, 7
          %p227 = scmp.gt.s32.totalorder %s226, 0
          %s228 = scalar_select %p227, %s226, 0
          %p229 = scmp.lt.s32.totalorder %s21, 1
          %s230 = scalar_select %p229, %s21, 1
          %p231 = scmp.lt.s32.totalorder %s228, 7
          %s232 = scalar_select %p231, %s228, 7
          %p233 = scmp.lt.s32.totalorder %s22, 1
          %s234 = scalar_select %p233, %s22, 1
          %s235 = smul.addr %s234, 20
          %s236 = smul.addr %s232, 40
          %s237 = sadd.s32 %s235, %s236
          %s238 = smul.addr %s230, 320
          %s239 = sadd.s32 %s237, %s238
          %s240 = smul.addr %s239, 8
          %s241 = scalar_lea.vmem %s0, %s240
          %p242 = scmp.lt.s32.totalorder %s23, 7
          %s243 = scalar_select %p242, %s23, 7
          %p244 = scmp.gt.s32.totalorder %s243, 0
          %s245 = scalar_select %p244, %s243, 0
        $region36: #{tpu_custom_call.1} parent=31 // pred_fallthru
          _
      $region32: #{tpu_custom_call.1} parent=5 // pred_fallthru
        _
      %p246 = scmp.le.s32.totalorder 1, %s14
      %p247 = scmp.lt.s32.totalorder %s14, 37
      %p248 = pnand %p246, %p247
      %p249 = pneg %p248
      // Predicated region
      $region37: #{tpu_custom_call.1} parent=5 // pred_check
        _
      $region38: #{tpu_custom_call.1} parent=5 // pred_check_branch
        %251 = sbr.rel (%p248) target = $region40
      $region39: #{tpu_custom_call.1} parent=5 // pred_region
        %s252 = ssub.s32 %s14, 1
        %p253 = scmp.lt.s32.totalorder %s26, 7
        %s254 = scalar_select %p253, %s26, 7
        %p255 = scmp.gt.s32.totalorder %s254, 0
        %s256 = scalar_select %p255, %s254, 0
        %p257 = scmp.lt.s32.totalorder %s24, 1
        %s258 = scalar_select %p257, %s24, 1
        %p259 = scmp.lt.s32.totalorder %s256, 7
        %s260 = scalar_select %p259, %s256, 7
        %p261 = scmp.lt.s32.totalorder %s25, 1
        %s262 = scalar_select %p261, %s25, 1
        %s263 = smul.addr %s262, 20
        %s264 = smul.addr %s260, 40
        %s265 = sadd.s32 %s263, %s264
        %s266 = smul.addr %s258, 320
        %s267 = sadd.s32 %s265, %s266
        %s268 = smul.addr %s267, 8
        %s269 = scalar_lea.vmem %s0, %s268
        %p270 = pneg %p71
        %p271 = pneg %p68
        %p272 = pneg %p92
        %p273 = pneg %p89
        %p274 = pneg %p113
        %p275 = pneg %p110
        %p276 = pneg %p134
        %p277 = pneg %p131
        %p278 = pneg %p155
        %p279 = pneg %p152
        %p280 = pneg %p191
        %p281 = pneg %p188
        %s282 = sand.u32 %s178, 1
        %s283 = scalar_lea.sflag [#allocation4], %s282
        %s284 = sand.u32 %s178, 1
        %s285 = smul.addr %s284, 128
        %s286 = scalar_lea.vmem [#allocation3], %s285
        %p287 = scmp.lt.s32.totalorder %s26, 7
        %s288 = scalar_select %p287, %s26, 7
        %p289 = scmp.gt.s32.totalorder %s288, 0
        %s290 = scalar_select %p289, %s288, 0
        %p291 = scmp.lt.s32.totalorder %s24, 1
        %s292 = scalar_select %p291, %s24, 1
        %p293 = scmp.lt.s32.totalorder %s290, 7
        %s294 = scalar_select %p293, %s290, 7
        %p295 = scmp.lt.s32.totalorder %s25, 1
        %s296 = scalar_select %p295, %s25, 1
        %s297 = smul.addr %s296, 20
        %s298 = smul.addr %s294, 40
        %s299 = sadd.s32 %s297, %s298
        %s300 = smul.addr %s292, 320
        %s301 = sadd.s32 %s299, %s300
        %s302 = smul.addr %s301, 8
        %s303 = scalar_lea.vmem %s0, %s302
        %p304 = scmp.lt.s32.totalorder %s26, 7
        %s305 = scalar_select %p304, %s26, 7
        %p306 = scmp.gt.s32.totalorder %s305, 0
        %s307 = scalar_select %p306, %s305, 0
        %s308 = sadd.s32 %s26, 4294967295
        %p309 = scmp.gt.s32.totalorder %s308, 0
        %s310 = scalar_select %p309, %s308, 0
        %s311 = sadd.s32 %s26, 1
        %v312 = vld [vmem:[%s303] sm:$0xff]
        %v313 = vld [vmem:[%s303 + $0x8] sm:$0xff]
        %v314 = vld [vmem:[%s303 + $0x10] sm:$0xff]
        %v315 = vld [vmem:[%s303 + $0x18] sm:$0xff]
        %v316 = vld [vmem:[%s303 + $0x20] sm:$0xff]
        %v317 = vld [vmem:[%s303 + $0x28] sm:$0xff]
        %v318 = vld [vmem:[%s303 + $0x30] sm:$0xff]
        %v319 = vld [vmem:[%s303 + $0x38] sm:$0xff]
        %v320 = vld [vmem:[%s303 + $0x40] sm:$0xff]
        %v321 = vld [vmem:[%s303 + $0x48] sm:$0xff]
        %v322 = vld [vmem:[%s303 + $0x50] sm:$0xff]
        %v323 = vld [vmem:[%s303 + $0x58] sm:$0xff]
        %v324 = vld [vmem:[%s303 + $0x60] sm:$0xff]
        %v325 = vld [vmem:[%s303 + $0x68] sm:$0xff]
        %v326 = vld [vmem:[%s303 + $0x70] sm:$0xff]
        %v327 = vld [vmem:[%s303 + $0x78] sm:$0xff]
        %v328 = vld [vmem:[%s1] sm:$0xff]
        %v329 = vld [vmem:[%s1 + $0x8] sm:$0xf]
        %v330 = vld [vmem:[%s303 + $0x80] sm:$0xff]
        %v331 = vld [vmem:[%s303 + $0x88] sm:$0xff]
        %s332 = scalar_lea.vmem %s1, 16
        %v333 = vld [vmem:[%s332] sm:$0xff]
        %v334 = vld [vmem:[%s332 + $0x8] sm:$0xf]
        %vm335 = vcmask 97280
        %v337 = vsel %vm335, %v314, 0
        %v340 = vsel %vm335, %v315, 0
        %v343 = vsel %vm335, %v316, 0
        %v346 = vsel %vm335, %v317, 0
        %v349 = vsel %vm335, %v318, 0
        %v352 = vsel %vm335, %v319, 0
        %v355 = vsel %vm335, %v320, 0
        %v358 = vsel %vm335, %v321, 0
        %v361 = vsel %vm335, %v322, 0
        %v364 = vsel %vm335, %v323, 0
        %v367 = vsel %vm335, %v324, 0
        %v370 = vsel %vm335, %v325, 0
        %v373 = vsel %vm335, %v326, 0
        %v376 = vsel %vm335, %v327, 0
        %v379 = vsel %vm335, %v330, 0
        %v382 = vsel %vm335, %v331, 0
        %vm384 = vcmask 1043456
        %v386 = vsel %vm384, %v334, 0
        %388 = vmatprep.subr.mxu0 0.0
        %389 = vmatpush1.msra.mxu0 0.0
        %390 = vmatprep.subr.mxu0 0.0
        %391 = vmatpush1.msra.mxu0 0.0
        %392 = vmatprep.subr.mxu0 0.0
        %393 = vmatpush1.msra.mxu0 0.0
        %394 = vmatprep.subr.mxu0 0.0
        %395 = vmatpush1.msra.mxu0 0.0
        %396 = vmatprep.subr.mxu0 0.0
        %397 = vmatpush1.msra.mxu0 0.0
        %398 = vmatprep.subr.mxu0 0.0
        %399 = vmatpush1.msra.mxu0 0.0
        %400 = vmatprep.subr.mxu0 0.0
        %401 = vmatpush1.msra.mxu0 0.0
        %402 = vmatprep.subr.mxu0 0.0
        %403 = vmatpush1.msra.mxu0 0.0
        %404 = vmatprep.subr.mxu0 0.0
        %405 = vmatpush1.msra.mxu0 0.0
        %406 = vmatprep.subr.mxu0 0.0
        %407 = vmatpush1.msra.mxu0 0.0
        %408 = vmatprep.subr.mxu0 0.0
        %409 = vmatpush1.msra.mxu0 0.0
        %410 = vmatprep.subr.mxu0 0.0
        %411 = vmatpush1.msra.mxu0 0.0
        %412 = vmatprep.subr.mxu0 0.0
        %413 = vmatpush1.msra.mxu0 0.0
        %414 = vmatprep.subr.mxu0 0.0
        %415 = vmatpush1.msra.mxu0 0.0
        %416 = vmatprep.subr.mxu0 0.0
        %417 = vmatpush1.msra.mxu0 %v386
        %418 = vmatprep.subr.mxu0 0.0
        %419 = vmatpush1.msra.mxu0 %v333
        %420 = vmatprep.subr.mxu0 0.0
        %421 = vmatpush2.msra.mxu0 0.0
        %422 = vmatprep.subr.mxu0 0.0
        %423 = vmatpush2.msra.mxu0 0.0
        %424 = vmatprep.subr.mxu0 0.0
        %425 = vmatpush2.msra.mxu0 0.0
        %426 = vmatprep.subr.mxu0 0.0
        %427 = vmatpush2.msra.mxu0 0.0
        %428 = vmatprep.subr.mxu0 0.0
        %429 = vmatpush2.msra.mxu0 0.0
        %430 = vmatprep.subr.mxu0 0.0
        %431 = vmatpush2.msra.mxu0 0.0
        %432 = vmatprep.subr.mxu0 0.0
        %433 = vmatpush2.msra.mxu0 0.0
        %434 = vmatprep.subr.mxu0 0.0
        %435 = vmatpush2.msra.mxu0 0.0
        %436 = vmatprep.subr.mxu0 0.0
        %437 = vmatpush2.msra.mxu0 0.0
        %438 = vmatprep.subr.mxu0 0.0
        %439 = vmatpush2.msra.mxu0 0.0
        %440 = vmatprep.subr.mxu0 0.0
        %441 = vmatpush2.msra.mxu0 0.0
        %442 = vmatprep.subr.mxu0 0.0
        %443 = vmatpush2.msra.mxu0 0.0
        %444 = vmatprep.subr.mxu0 0.0
        %445 = vmatpush2.msra.mxu0 0.0
        %446 = vmatprep.subr.mxu0 0.0
        %447 = vmatpush2.msra.mxu0 0.0
        %448 = vmatprep.subr.mxu0 0.0
        %449 = vmatpush2.msra.mxu0 0.0
        %450 = vmatprep.subr.mxu0 0.0
        %451 = vmatpush2.msra.mxu0 0.0
        %452 = vmatprep.mubr.f32.mxu0 0.0
        %453 = vmatmul.mubr.f32.gmra.mxu0 %v337
        %v454 = vpop.f32.mrf.mxu0
        %v455 = vadd.f32 0.0, %v454
        %v456 = vpop.f32.mrf.mxu0
        %457 = vmatprep.mubr.f32.mxu0 0.0
        %458 = vmatmul.mubr.f32.gmra.mxu0 %v340
        %v459 = vpop.f32.mrf.mxu0
        %v460 = vadd.f32 0.0, %v459
        %v461 = vpop.f32.mrf.mxu0
        %462 = vmatprep.mubr.f32.mxu0 0.0
        %463 = vmatmul.mubr.f32.gmra.mxu0 %v343
        %v464 = vpop.f32.mrf.mxu0
        %v465 = vadd.f32 0.0, %v464
        %v466 = vpop.f32.mrf.mxu0
        %467 = vmatprep.mubr.f32.mxu0 0.0
        %468 = vmatmul.mubr.f32.gmra.mxu0 %v346
        %v469 = vpop.f32.mrf.mxu0
        %v470 = vadd.f32 0.0, %v469
        %v471 = vpop.f32.mrf.mxu0
        %472 = vmatprep.mubr.f32.mxu0 0.0
        %473 = vmatmul.mubr.f32.gmra.mxu0 %v349
        %v474 = vpop.f32.mrf.mxu0
        %v475 = vadd.f32 0.0, %v474
        %v476 = vpop.f32.mrf.mxu0
        %477 = vmatprep.mubr.f32.mxu0 0.0
        %478 = vmatmul.mubr.f32.gmra.mxu0 %v352
        %v479 = vpop.f32.mrf.mxu0
        %v480 = vadd.f32 0.0, %v479
        %v481 = vpop.f32.mrf.mxu0
        %482 = vmatprep.mubr.f32.mxu0 0.0
        %483 = vmatmul.mubr.f32.gmra.mxu0 %v355
        %v484 = vpop.f32.mrf.mxu0
        %v485 = vadd.f32 0.0, %v484
        %v486 = vpop.f32.mrf.mxu0
        %487 = vmatprep.mubr.f32.mxu0 0.0
        %488 = vmatmul.mubr.f32.gmra.mxu0 %v358
        %v489 = vpop.f32.mrf.mxu0
        %v490 = vadd.f32 0.0, %v489
        %v491 = vpop.f32.mrf.mxu0
        %492 = vmatprep.mubr.f32.mxu0 0.0
        %493 = vmatmul.mubr.f32.gmra.mxu0 %v361
        %v494 = vpop.f32.mrf.mxu0
        %v495 = vadd.f32 0.0, %v494
        %v496 = vpop.f32.mrf.mxu0
        %497 = vmatprep.mubr.f32.mxu0 0.0
        %498 = vmatmul.mubr.f32.gmra.mxu0 %v364
        %v499 = vpop.f32.mrf.mxu0
        %v500 = vadd.f32 0.0, %v499
        %v501 = vpop.f32.mrf.mxu0
        %502 = vmatprep.mubr.f32.mxu0 0.0
        %503 = vmatmul.mubr.f32.gmra.mxu0 %v367
        %v504 = vpop.f32.mrf.mxu0
        %v505 = vadd.f32 0.0, %v504
        %v506 = vpop.f32.mrf.mxu0
        %507 = vmatprep.mubr.f32.mxu0 0.0
        %508 = vmatmul.mubr.f32.gmra.mxu0 %v370
        %v509 = vpop.f32.mrf.mxu0
        %v510 = vadd.f32 0.0, %v509
        %v511 = vpop.f32.mrf.mxu0
        %512 = vmatprep.mubr.f32.mxu0 0.0
        %513 = vmatmul.mubr.f32.gmra.mxu0 %v373
        %v514 = vpop.f32.mrf.mxu0
        %v515 = vadd.f32 0.0, %v514
        %v516 = vpop.f32.mrf.mxu0
        %517 = vmatprep.mubr.f32.mxu0 0.0
        %518 = vmatmul.mubr.f32.gmra.mxu0 %v376
        %v519 = vpop.f32.mrf.mxu0
        %v520 = vadd.f32 0.0, %v519
        %v521 = vpop.f32.mrf.mxu0
        %522 = vmatprep.mubr.f32.mxu0 0.0
        %523 = vmatmul.mubr.f32.gmra.mxu0 %v379
        %v524 = vpop.f32.mrf.mxu0
        %v525 = vadd.f32 0.0, %v524
        %v526 = vpop.f32.mrf.mxu0
        %527 = vmatprep.mubr.f32.mxu0 0.0
        %528 = vmatmul.mubr.f32.gmra.mxu0 %v382
        %v529 = vpop.f32.mrf.mxu0
        %v530 = vadd.f32 0.0, %v529
        %v531 = vpop.f32.mrf.mxu0
        %532 = vdwg.mxu0
        %v534 = vsel %vm335, %v312, 0
        %v537 = vsel %vm335, %v313, 0
        %v540 = vsel %vm384, %v329, 0
        %542 = vmatprep.subr.mxu0 0.0
        %543 = vmatpush1.msra.mxu0 0.0
        %544 = vmatprep.subr.mxu0 0.0
        %545 = vmatpush1.msra.mxu0 0.0
        %546 = vmatprep.subr.mxu0 0.0
        %547 = vmatpush1.msra.mxu0 0.0
        %548 = vmatprep.subr.mxu0 0.0
        %549 = vmatpush1.msra.mxu0 0.0
        %550 = vmatprep.subr.mxu0 0.0
        %551 = vmatpush1.msra.mxu0 0.0
        %552 = vmatprep.subr.mxu0 0.0
        %553 = vmatpush1.msra.mxu0 0.0
        %554 = vmatprep.subr.mxu0 0.0
        %555 = vmatpush1.msra.mxu0 0.0
        %556 = vmatprep.subr.mxu0 0.0
        %557 = vmatpush1.msra.mxu0 0.0
        %558 = vmatprep.subr.mxu0 0.0
        %559 = vmatpush1.msra.mxu0 0.0
        %560 = vmatprep.subr.mxu0 0.0
        %561 = vmatpush1.msra.mxu0 0.0
        %562 = vmatprep.subr.mxu0 0.0
        %563 = vmatpush1.msra.mxu0 0.0
        %564 = vmatprep.subr.mxu0 0.0
        %565 = vmatpush1.msra.mxu0 0.0
        %566 = vmatprep.subr.mxu0 0.0
        %567 = vmatpush1.msra.mxu0 0.0
        %568 = vmatprep.subr.mxu0 0.0
        %569 = vmatpush1.msra.mxu0 0.0
        %570 = vmatprep.subr.mxu0 0.0
        %571 = vmatpush1.msra.mxu0 %v540
        %572 = vmatprep.subr.mxu0 0.0
        %573 = vmatpush1.msra.mxu0 %v328
        %574 = vmatprep.subr.mxu0 0.0
        %575 = vmatpush2.msra.mxu0 0.0
        %576 = vmatprep.subr.mxu0 0.0
        %577 = vmatpush2.msra.mxu0 0.0
        %578 = vmatprep.subr.mxu0 0.0
        %579 = vmatpush2.msra.mxu0 0.0
        %580 = vmatprep.subr.mxu0 0.0
        %581 = vmatpush2.msra.mxu0 0.0
        %582 = vmatprep.subr.mxu0 0.0
        %583 = vmatpush2.msra.mxu0 0.0
        %584 = vmatprep.subr.mxu0 0.0
        %585 = vmatpush2.msra.mxu0 0.0
        %586 = vmatprep.subr.mxu0 0.0
        %587 = vmatpush2.msra.mxu0 0.0
        %588 = vmatprep.subr.mxu0 0.0
        %589 = vmatpush2.msra.mxu0 0.0
        %590 = vmatprep.subr.mxu0 0.0
        %591 = vmatpush2.msra.mxu0 0.0
        %592 = vmatprep.subr.mxu0 0.0
        %593 = vmatpush2.msra.mxu0 0.0
        %594 = vmatprep.subr.mxu0 0.0
        %595 = vmatpush2.msra.mxu0 0.0
        %596 = vmatprep.subr.mxu0 0.0
        %597 = vmatpush2.msra.mxu0 0.0
        %598 = vmatprep.subr.mxu0 0.0
        %599 = vmatpush2.msra.mxu0 0.0
        %600 = vmatprep.subr.mxu0 0.0
        %601 = vmatpush2.msra.mxu0 0.0
        %602 = vmatprep.subr.mxu0 0.0
        %603 = vmatpush2.msra.mxu0 0.0
        %604 = vmatprep.subr.mxu0 0.0
        %605 = vmatpush2.msra.mxu0 0.0
        %606 = vmatprep.mubr.f32.mxu0 0.0
        %607 = vmatmul.mubr.f32.gmra.mxu0 %v534
        %v608 = vpop.f32.mrf.mxu0
        %v609 = vadd.f32 %v455, %v608
        %v610 = vpop.f32.mrf.mxu0
        %611 = vmatprep.mubr.f32.mxu0 0.0
        %612 = vmatmul.mubr.f32.gmra.mxu0 %v537
        %v613 = vpop.f32.mrf.mxu0
        %v614 = vadd.f32 %v460, %v613
        %v615 = vpop.f32.mrf.mxu0
        %616 = vmatprep.mubr.f32.mxu0 0.0
        %617 = vmatmul.mubr.f32.gmra.mxu0 %v337
        %v618 = vpop.f32.mrf.mxu0
        %v619 = vadd.f32 %v465, %v618
        %v620 = vpop.f32.mrf.mxu0
        %621 = vmatprep.mubr.f32.mxu0 0.0
        %622 = vmatmul.mubr.f32.gmra.mxu0 %v340
        %v623 = vpop.f32.mrf.mxu0
        %v624 = vadd.f32 %v470, %v623
        %v625 = vpop.f32.mrf.mxu0
        %626 = vmatprep.mubr.f32.mxu0 0.0
        %627 = vmatmul.mubr.f32.gmra.mxu0 %v343
        %v628 = vpop.f32.mrf.mxu0
        %v629 = vadd.f32 %v475, %v628
        %v630 = vpop.f32.mrf.mxu0
        %631 = vmatprep.mubr.f32.mxu0 0.0
        %632 = vmatmul.mubr.f32.gmra.mxu0 %v346
        %v633 = vpop.f32.mrf.mxu0
        %v634 = vadd.f32 %v480, %v633
        %v635 = vpop.f32.mrf.mxu0
        %636 = vmatprep.mubr.f32.mxu0 0.0
        %637 = vmatmul.mubr.f32.gmra.mxu0 %v349
        %v638 = vpop.f32.mrf.mxu0
        %v639 = vadd.f32 %v485, %v638
        %v640 = vpop.f32.mrf.mxu0
        %641 = vmatprep.mubr.f32.mxu0 0.0
        %642 = vmatmul.mubr.f32.gmra.mxu0 %v352
        %v643 = vpop.f32.mrf.mxu0
        %v644 = vadd.f32 %v490, %v643
        %v645 = vpop.f32.mrf.mxu0
        %646 = vmatprep.mubr.f32.mxu0 0.0
        %647 = vmatmul.mubr.f32.gmra.mxu0 %v355
        %v648 = vpop.f32.mrf.mxu0
        %v649 = vadd.f32 %v495, %v648
        %v650 = vpop.f32.mrf.mxu0
        %651 = vmatprep.mubr.f32.mxu0 0.0
        %652 = vmatmul.mubr.f32.gmra.mxu0 %v358
        %v653 = vpop.f32.mrf.mxu0
        %v654 = vadd.f32 %v500, %v653
        %v655 = vpop.f32.mrf.mxu0
        %656 = vmatprep.mubr.f32.mxu0 0.0
        %657 = vmatmul.mubr.f32.gmra.mxu0 %v361
        %v658 = vpop.f32.mrf.mxu0
        %v659 = vadd.f32 %v505, %v658
        %v660 = vpop.f32.mrf.mxu0
        %661 = vmatprep.mubr.f32.mxu0 0.0
        %662 = vmatmul.mubr.f32.gmra.mxu0 %v364
        %v663 = vpop.f32.mrf.mxu0
        %v664 = vadd.f32 %v510, %v663
        %v665 = vpop.f32.mrf.mxu0
        %666 = vmatprep.mubr.f32.mxu0 0.0
        %667 = vmatmul.mubr.f32.gmra.mxu0 %v367
        %v668 = vpop.f32.mrf.mxu0
        %v669 = vadd.f32 %v515, %v668
        %v670 = vpop.f32.mrf.mxu0
        %671 = vmatprep.mubr.f32.mxu0 0.0
        %672 = vmatmul.mubr.f32.gmra.mxu0 %v370
        %v673 = vpop.f32.mrf.mxu0
        %v674 = vadd.f32 %v520, %v673
        %v675 = vpop.f32.mrf.mxu0
        %676 = vmatprep.mubr.f32.mxu0 0.0
        %677 = vmatmul.mubr.f32.gmra.mxu0 %v373
        %v678 = vpop.f32.mrf.mxu0
        %v679 = vadd.f32 %v525, %v678
        %v680 = vpop.f32.mrf.mxu0
        %681 = vmatprep.mubr.f32.mxu0 0.0
        %682 = vmatmul.mubr.f32.gmra.mxu0 %v376
        %v683 = vpop.f32.mrf.mxu0
        %v684 = vadd.f32 %v530, %v683
        %v685 = vpop.f32.mrf.mxu0
        %686 = vdwg.mxu0
        %v687 = vld [vmem:[%s303 + $0x20] sm:$0xff]
        %v688 = vld [vmem:[%s303 + $0x28] sm:$0xff]
        %v689 = vld [vmem:[%s303 + $0x30] sm:$0xff]
        %v690 = vld [vmem:[%s303 + $0x38] sm:$0xff]
        %v691 = vld [vmem:[%s303 + $0x40] sm:$0xff]
        %v692 = vld [vmem:[%s303 + $0x48] sm:$0xff]
        %v693 = vld [vmem:[%s303 + $0x50] sm:$0xff]
        %v694 = vld [vmem:[%s303 + $0x58] sm:$0xff]
        %v695 = vld [vmem:[%s303 + $0x60] sm:$0xff]
        %v696 = vld [vmem:[%s303 + $0x68] sm:$0xff]
        %v697 = vld [vmem:[%s303 + $0x70] sm:$0xff]
        %v698 = vld [vmem:[%s303 + $0x78] sm:$0xff]
        %v699 = vld [vmem:[%s303 + $0x80] sm:$0xff]
        %v700 = vld [vmem:[%s303 + $0x88] sm:$0xff]
        %v701 = vld [vmem:[%s303 + $0x90] sm:$0xff]
        %v702 = vld [vmem:[%s303 + $0x98] sm:$0xff]
        %s703 = scalar_lea.vmem %s1, 32
        %v704 = vld [vmem:[%s703] sm:$0xff]
        %v705 = vld [vmem:[%s703 + $0x8] sm:$0xf]
        %v707 = vsel %vm335, %v687, 0
        %v710 = vsel %vm335, %v688, 0
        %v713 = vsel %vm335, %v689, 0
        %v716 = vsel %vm335, %v690, 0
        %v719 = vsel %vm335, %v691, 0
        %v722 = vsel %vm335, %v692, 0
        %v725 = vsel %vm335, %v693, 0
        %v728 = vsel %vm335, %v694, 0
        %v731 = vsel %vm335, %v695, 0
        %v734 = vsel %vm335, %v696, 0
        %v737 = vsel %vm335, %v697, 0
        %v740 = vsel %vm335, %v698, 0
        %v743 = vsel %vm335, %v699, 0
        %v746 = vsel %vm335, %v700, 0
        %v749 = vsel %vm335, %v701, 0
        %v752 = vsel %vm335, %v702, 0
        %v755 = vsel %vm384, %v705, 0
        %757 = vmatprep.subr.mxu0 0.0
        %758 = vmatpush1.msra.mxu0 0.0
        %759 = vmatprep.subr.mxu0 0.0
        %760 = vmatpush1.msra.mxu0 0.0
        %761 = vmatprep.subr.mxu0 0.0
        %762 = vmatpush1.msra.mxu0 0.0
        %763 = vmatprep.subr.mxu0 0.0
        %764 = vmatpush1.msra.mxu0 0.0
        %765 = vmatprep.subr.mxu0 0.0
        %766 = vmatpush1.msra.mxu0 0.0
        %767 = vmatprep.subr.mxu0 0.0
        %768 = vmatpush1.msra.mxu0 0.0
        %769 = vmatprep.subr.mxu0 0.0
        %770 = vmatpush1.msra.mxu0 0.0
        %771 = vmatprep.subr.mxu0 0.0
        %772 = vmatpush1.msra.mxu0 0.0
        %773 = vmatprep.subr.mxu0 0.0
        %774 = vmatpush1.msra.mxu0 0.0
        %775 = vmatprep.subr.mxu0 0.0
        %776 = vmatpush1.msra.mxu0 0.0
        %777 = vmatprep.subr.mxu0 0.0
        %778 = vmatpush1.msra.mxu0 0.0
        %779 = vmatprep.subr.mxu0 0.0
        %780 = vmatpush1.msra.mxu0 0.0
        %781 = vmatprep.subr.mxu0 0.0
        %782 = vmatpush1.msra.mxu0 0.0
        %783 = vmatprep.subr.mxu0 0.0
        %784 = vmatpush1.msra.mxu0 0.0
        %785 = vmatprep.subr.mxu0 0.0
        %786 = vmatpush1.msra.mxu0 %v755
        %787 = vmatprep.subr.mxu0 0.0
        %788 = vmatpush1.msra.mxu0 %v704
        %789 = vmatprep.subr.mxu0 0.0
        %790 = vmatpush2.msra.mxu0 0.0
        %791 = vmatprep.subr.mxu0 0.0
        %792 = vmatpush2.msra.mxu0 0.0
        %793 = vmatprep.subr.mxu0 0.0
        %794 = vmatpush2.msra.mxu0 0.0
        %795 = vmatprep.subr.mxu0 0.0
        %796 = vmatpush2.msra.mxu0 0.0
        %797 = vmatprep.subr.mxu0 0.0
        %798 = vmatpush2.msra.mxu0 0.0
        %799 = vmatprep.subr.mxu0 0.0
        %800 = vmatpush2.msra.mxu0 0.0
        %801 = vmatprep.subr.mxu0 0.0
        %802 = vmatpush2.msra.mxu0 0.0
        %803 = vmatprep.subr.mxu0 0.0
        %804 = vmatpush2.msra.mxu0 0.0
        %805 = vmatprep.subr.mxu0 0.0
        %806 = vmatpush2.msra.mxu0 0.0
        %807 = vmatprep.subr.mxu0 0.0
        %808 = vmatpush2.msra.mxu0 0.0
        %809 = vmatprep.subr.mxu0 0.0
        %810 = vmatpush2.msra.mxu0 0.0
        %811 = vmatprep.subr.mxu0 0.0
        %812 = vmatpush2.msra.mxu0 0.0
        %813 = vmatprep.subr.mxu0 0.0
        %814 = vmatpush2.msra.mxu0 0.0
        %815 = vmatprep.subr.mxu0 0.0
        %816 = vmatpush2.msra.mxu0 0.0
        %817 = vmatprep.subr.mxu0 0.0
        %818 = vmatpush2.msra.mxu0 0.0
        %819 = vmatprep.subr.mxu0 0.0
        %820 = vmatpush2.msra.mxu0 0.0
        %821 = vmatprep.mubr.f32.mxu0 0.0
        %822 = vmatmul.mubr.f32.gmra.mxu0 %v707
        %v823 = vpop.f32.mrf.mxu0
        %v824 = vadd.f32 0.0, %v823
        %v825 = vpop.f32.mrf.mxu0
        %826 = vmatprep.mubr.f32.mxu0 0.0
        %827 = vmatmul.mubr.f32.gmra.mxu0 %v710
        %v828 = vpop.f32.mrf.mxu0
        %v829 = vadd.f32 0.0, %v828
        %v830 = vpop.f32.mrf.mxu0
        %831 = vmatprep.mubr.f32.mxu0 0.0
        %832 = vmatmul.mubr.f32.gmra.mxu0 %v713
        %v833 = vpop.f32.mrf.mxu0
        %v834 = vadd.f32 0.0, %v833
        %v835 = vpop.f32.mrf.mxu0
        %836 = vmatprep.mubr.f32.mxu0 0.0
        %837 = vmatmul.mubr.f32.gmra.mxu0 %v716
        %v838 = vpop.f32.mrf.mxu0
        %v839 = vadd.f32 0.0, %v838
        %v840 = vpop.f32.mrf.mxu0
        %841 = vmatprep.mubr.f32.mxu0 0.0
        %842 = vmatmul.mubr.f32.gmra.mxu0 %v719
        %v843 = vpop.f32.mrf.mxu0
        %v844 = vadd.f32 0.0, %v843
        %v845 = vpop.f32.mrf.mxu0
        %846 = vmatprep.mubr.f32.mxu0 0.0
        %847 = vmatmul.mubr.f32.gmra.mxu0 %v722
        %v848 = vpop.f32.mrf.mxu0
        %v849 = vadd.f32 0.0, %v848
        %v850 = vpop.f32.mrf.mxu0
        %851 = vmatprep.mubr.f32.mxu0 0.0
        %852 = vmatmul.mubr.f32.gmra.mxu0 %v725
        %v853 = vpop.f32.mrf.mxu0
        %v854 = vadd.f32 0.0, %v853
        %v855 = vpop.f32.mrf.mxu0
        %856 = vmatprep.mubr.f32.mxu0 0.0
        %857 = vmatmul.mubr.f32.gmra.mxu0 %v728
        %v858 = vpop.f32.mrf.mxu0
        %v859 = vadd.f32 0.0, %v858
        %v860 = vpop.f32.mrf.mxu0
        %861 = vmatprep.mubr.f32.mxu0 0.0
        %862 = vmatmul.mubr.f32.gmra.mxu0 %v731
        %v863 = vpop.f32.mrf.mxu0
        %v864 = vadd.f32 0.0, %v863
        %v865 = vpop.f32.mrf.mxu0
        %866 = vmatprep.mubr.f32.mxu0 0.0
        %867 = vmatmul.mubr.f32.gmra.mxu0 %v734
        %v868 = vpop.f32.mrf.mxu0
        %v869 = vadd.f32 0.0, %v868
        %v870 = vpop.f32.mrf.mxu0
        %871 = vmatprep.mubr.f32.mxu0 0.0
        %872 = vmatmul.mubr.f32.gmra.mxu0 %v737
        %v873 = vpop.f32.mrf.mxu0
        %v874 = vadd.f32 0.0, %v873
        %v875 = vpop.f32.mrf.mxu0
        %876 = vmatprep.mubr.f32.mxu0 0.0
        %877 = vmatmul.mubr.f32.gmra.mxu0 %v740
        %v878 = vpop.f32.mrf.mxu0
        %v879 = vadd.f32 0.0, %v878
        %v880 = vpop.f32.mrf.mxu0
        %881 = vmatprep.mubr.f32.mxu0 0.0
        %882 = vmatmul.mubr.f32.gmra.mxu0 %v743
        %v883 = vpop.f32.mrf.mxu0
        %v884 = vadd.f32 0.0, %v883
        %v885 = vpop.f32.mrf.mxu0
        %886 = vmatprep.mubr.f32.mxu0 0.0
        %887 = vmatmul.mubr.f32.gmra.mxu0 %v746
        %v888 = vpop.f32.mrf.mxu0
        %v889 = vadd.f32 0.0, %v888
        %v890 = vpop.f32.mrf.mxu0
        %891 = vmatprep.mubr.f32.mxu0 0.0
        %892 = vmatmul.mubr.f32.gmra.mxu0 %v749
        %v893 = vpop.f32.mrf.mxu0
        %v894 = vadd.f32 0.0, %v893
        %v895 = vpop.f32.mrf.mxu0
        %896 = vmatprep.mubr.f32.mxu0 0.0
        %897 = vmatmul.mubr.f32.gmra.mxu0 %v752
        %v898 = vpop.f32.mrf.mxu0
        %v899 = vadd.f32 0.0, %v898
        %v900 = vpop.f32.mrf.mxu0
        %901 = vdwg.mxu0
        %v902 = vadd.f32 %v609, %v824
        %v903 = vadd.f32 %v614, %v829
        %v904 = vadd.f32 %v619, %v834
        %v905 = vadd.f32 %v624, %v839
        %v906 = vadd.f32 %v629, %v844
        %v907 = vadd.f32 %v634, %v849
        %v908 = vadd.f32 %v639, %v854
        %v909 = vadd.f32 %v644, %v859
        %v910 = vadd.f32 %v649, %v864
        %v911 = vadd.f32 %v654, %v869
        %v912 = vadd.f32 %v659, %v874
        %v913 = vadd.f32 %v664, %v879
        %v914 = vadd.f32 %v669, %v884
        %v915 = vadd.f32 %v674, %v889
        %v916 = vadd.f32 %v679, %v894
        %v917 = vadd.f32 %v684, %v899
        %v918 = vld [vmem:[%s2] sm:$0x1]
        %v920 = vlaneseq
        %v921 = vshrl.u32 %v920, 7
        %v922 = vsub.s32 0, %v921
        %v923 = vrot.slane %v918, %v922
        %v925 = vadd.f32 %v902, %v923
        %v926 = vadd.f32 %v903, %v923
        %v927 = vadd.f32 %v904, %v923
        %v928 = vadd.f32 %v905, %v923
        %v929 = vadd.f32 %v906, %v923
        %v930 = vadd.f32 %v907, %v923
        %v931 = vadd.f32 %v908, %v923
        %v932 = vadd.f32 %v909, %v923
        %v933 = vadd.f32 %v910, %v923
        %v934 = vadd.f32 %v911, %v923
        %v935 = vadd.f32 %v912, %v923
        %v936 = vadd.f32 %v913, %v923
        %v937 = vadd.f32 %v914, %v923
        %v938 = vadd.f32 %v915, %v923
        %v939 = vadd.f32 %v916, %v923
        %v940 = vadd.f32 %v917, %v923
        %p941 = scmp.ge.s32.totalorder %s311, 1
        %p942 = scmp.lt.s32.totalorder %s311, 9
        %p943 = pnand %p941, %p942
        %p944 = pneg %p943
        %s945 = scalar_select %p944, 1, 0
        %v946 = vstv %s945
        %vm947 = vcmp.eq.s32.totalorder %v946, 1
        %v948 = vsel %vm947, %v925, 0.0
        %v949 = vsel %vm947, %v926, 0.0
        %v950 = vsel %vm947, %v927, 0.0
        %v951 = vsel %vm947, %v928, 0.0
        %v952 = vsel %vm947, %v929, 0.0
        %v953 = vsel %vm947, %v930, 0.0
        %v954 = vsel %vm947, %v931, 0.0
        %v955 = vsel %vm947, %v932, 0.0
        %v956 = vsel %vm947, %v933, 0.0
        %v957 = vsel %vm947, %v934, 0.0
        %v958 = vsel %vm947, %v935, 0.0
        %v959 = vsel %vm947, %v936, 0.0
        %v960 = vsel %vm947, %v937, 0.0
        %v961 = vsel %vm947, %v938, 0.0
        %v962 = vsel %vm947, %v939, 0.0
        %v963 = vsel %vm947, %v940, 0.0
        %p964 = scmp.eq.s32.totalorder %s26, 0
        // Predicated region
        $region41: #{tpu_custom_call.1} parent=39 // pred_check
          %p965 = pneg %p964
        $region42: #{tpu_custom_call.1} parent=39 // pred_check_branch
          %967 = sbr.rel (%p965) target = $region44
        $region43: #{tpu_custom_call.1} parent=39 // pred_region
          %968 = vst [vmem:[#allocation2] sm:$0xff] 0.0
          %969 = vst [vmem:[#allocation2 + $0x8] sm:$0xff] 0.0
          %970 = vst [vmem:[#allocation2 + $0x10] sm:$0xff] 0.0
          %971 = vst [vmem:[#allocation2 + $0x18] sm:$0xff] 0.0
          %972 = vst [vmem:[#allocation2 + $0x20] sm:$0xff] 0.0
          %973 = vst [vmem:[#allocation2 + $0x28] sm:$0xff] 0.0
          %974 = vst [vmem:[#allocation2 + $0x30] sm:$0xff] 0.0
          %975 = vst [vmem:[#allocation2 + $0x38] sm:$0xff] 0.0
          %976 = vst [vmem:[#allocation2 + $0x40] sm:$0xff] 0.0
          %977 = vst [vmem:[#allocation2 + $0x48] sm:$0xff] 0.0
          %978 = vst [vmem:[#allocation2 + $0x50] sm:$0xff] 0.0
          %979 = vst [vmem:[#allocation2 + $0x58] sm:$0xff] 0.0
          %980 = vst [vmem:[#allocation2 + $0x60] sm:$0xff] 0.0
          %981 = vst [vmem:[#allocation2 + $0x68] sm:$0xff] 0.0
          %982 = vst [vmem:[#allocation2 + $0x70] sm:$0xff] 0.0
          %983 = vst [vmem:[#allocation2 + $0x78] sm:$0xff] 0.0
        $region44: #{tpu_custom_call.1} parent=39 // pred_fallthru
          _
        %p984 = scmp.lt.s32.totalorder %s311, 0
        %s985 = ssub.s32 0, %s311
        %s986 = scalar_select %p984, %s985, %s311
        %s987 = sdiv.u32.pop %s986, 3
        %s988 = srem.u32.pop %s986, 3
        %s989 = ssub.s32 0, %s988
        %s990 = scalar_select %p984, %s989, %s988
        %p991 = scmp.ne.s32.totalorder %s990, 0
        %p992 = scmp.lt.s32.totalorder %s990, 0
        %p993 = pnand %p992, %p991
        %p994 = pneg %p993
        %s995 = sadd.s32 %s990, 3
        %s996 = scalar_select %p994, %s995, %s990
        %s997 = smul.u32 %s996, 128
        %s998 = scalar_lea.vmem [#allocation2], %s997
        %999 = vst [vmem:[%s998] sm:$0xff] %v948
        %1000 = vst [vmem:[%s998 + $0x8] sm:$0xff] %v949
        %1001 = vst [vmem:[%s998 + $0x10] sm:$0xff] %v950
        %1002 = vst [vmem:[%s998 + $0x18] sm:$0xff] %v951
        %1003 = vst [vmem:[%s998 + $0x20] sm:$0xff] %v952
        %1004 = vst [vmem:[%s998 + $0x28] sm:$0xff] %v953
        %1005 = vst [vmem:[%s998 + $0x30] sm:$0xff] %v954
        %1006 = vst [vmem:[%s998 + $0x38] sm:$0xff] %v955
        %1007 = vst [vmem:[%s998 + $0x40] sm:$0xff] %v956
        %1008 = vst [vmem:[%s998 + $0x48] sm:$0xff] %v957
        %1009 = vst [vmem:[%s998 + $0x50] sm:$0xff] %v958
        %1010 = vst [vmem:[%s998 + $0x58] sm:$0xff] %v959
        %1011 = vst [vmem:[%s998 + $0x60] sm:$0xff] %v960
        %1012 = vst [vmem:[%s998 + $0x68] sm:$0xff] %v961
        %1013 = vst [vmem:[%s998 + $0x70] sm:$0xff] %v962
        %1014 = vst [vmem:[%s998 + $0x78] sm:$0xff] %v963
        %p1015 = scmp.ge.s32.totalorder %s311, 2
        // Predicated region
        $region45: #{tpu_custom_call.1} parent=39 // pred_check
          %p1016 = pneg %p1015
        $region46: #{tpu_custom_call.1} parent=39 // pred_check_branch
          %1018 = sbr.rel (%p1016) target = $region48
        $region47: #{tpu_custom_call.1} parent=39 // pred_region
          %s1019 = sadd.s32 %s26, 4294967295
          %s1020 = scalar_lea.vmem %s3, 256
          %v1021 = vld [vmem:[%s1020] sm:$0xff]
          %v1022 = vld [vmem:[%s1020 + $0x8] sm:$0xff]
          %v1023 = vld [vmem:[%s1020 + $0x10] sm:$0xff]
          %v1024 = vld [vmem:[%s1020 + $0x18] sm:$0xff]
          %v1025 = vld [vmem:[%s1020 + $0x20] sm:$0xff]
          %v1026 = vld [vmem:[%s1020 + $0x28] sm:$0xff]
          %v1027 = vld [vmem:[%s1020 + $0x30] sm:$0xff]
          %v1028 = vld [vmem:[%s1020 + $0x38] sm:$0xff]
          %v1029 = vld [vmem:[%s1020 + $0x40] sm:$0xff]
          %v1030 = vld [vmem:[%s1020 + $0x48] sm:$0xff]
          %v1031 = vld [vmem:[%s1020 + $0x50] sm:$0xff]
          %v1032 = vld [vmem:[%s1020 + $0x58] sm:$0xff]
          %v1033 = vld [vmem:[%s1020 + $0x60] sm:$0xff]
          %v1034 = vld [vmem:[%s1020 + $0x68] sm:$0xff]
          %v1035 = vld [vmem:[%s1020 + $0x70] sm:$0xff]
          %v1036 = vld [vmem:[%s1020 + $0x78] sm:$0xff]
          %p1037 = scmp.lt.s32.totalorder %s1019, 0
          %s1038 = ssub.s32 0, %s1019
          %s1039 = scalar_select %p1037, %s1038, %s1019
          %s1040 = sdiv.u32.pop %s1039, 3
          %s1041 = srem.u32.pop %s1039, 3
          %s1042 = ssub.s32 0, %s1041
          %s1043 = scalar_select %p1037, %s1042, %s1041
          %p1044 = scmp.ne.s32.totalorder %s1043, 0
          %p1045 = scmp.lt.s32.totalorder %s1043, 0
          %p1046 = pnand %p1045, %p1044
          %p1047 = pneg %p1046
          %s1048 = sadd.s32 %s1043, 3
          %s1049 = scalar_select %p1047, %s1048, %s1043
          %s1050 = smul.u32 %s1049, 128
          %s1051 = scalar_lea.vmem [#allocation2], %s1050
          %v1052 = vld [vmem:[%s1051] sm:$0xff]
          %v1053 = vld [vmem:[%s1051 + $0x8] sm:$0xff]
          %v1054 = vld [vmem:[%s1051 + $0x10] sm:$0xff]
          %v1055 = vld [vmem:[%s1051 + $0x18] sm:$0xff]
          %v1056 = vld [vmem:[%s1051 + $0x20] sm:$0xff]
          %v1057 = vld [vmem:[%s1051 + $0x28] sm:$0xff]
          %v1058 = vld [vmem:[%s1051 + $0x30] sm:$0xff]
          %v1059 = vld [vmem:[%s1051 + $0x38] sm:$0xff]
          %v1060 = vld [vmem:[%s1051 + $0x40] sm:$0xff]
          %v1061 = vld [vmem:[%s1051 + $0x48] sm:$0xff]
          %v1062 = vld [vmem:[%s1051 + $0x50] sm:$0xff]
          %v1063 = vld [vmem:[%s1051 + $0x58] sm:$0xff]
          %v1064 = vld [vmem:[%s1051 + $0x60] sm:$0xff]
          %v1065 = vld [vmem:[%s1051 + $0x68] sm:$0xff]
          %v1066 = vld [vmem:[%s1051 + $0x70] sm:$0xff]
          %v1067 = vld [vmem:[%s1051 + $0x78] sm:$0xff]
          %v1068 = vld [vmem:[%s3] sm:$0xff]
          %v1069 = vld [vmem:[%s3 + $0x8] sm:$0xff]
          %v1070 = vld [vmem:[%s3 + $0x10] sm:$0xff]
          %v1071 = vld [vmem:[%s3 + $0x18] sm:$0xff]
          %v1072 = vld [vmem:[%s3 + $0x20] sm:$0xff]
          %v1073 = vld [vmem:[%s3 + $0x28] sm:$0xff]
          %v1074 = vld [vmem:[%s3 + $0x30] sm:$0xff]
          %v1075 = vld [vmem:[%s3 + $0x38] sm:$0xff]
          %v1076 = vld [vmem:[%s3 + $0x40] sm:$0xff]
          %v1077 = vld [vmem:[%s3 + $0x48] sm:$0xff]
          %v1078 = vld [vmem:[%s3 + $0x50] sm:$0xff]
          %v1079 = vld [vmem:[%s3 + $0x58] sm:$0xff]
          %v1080 = vld [vmem:[%s3 + $0x60] sm:$0xff]
          %v1081 = vld [vmem:[%s3 + $0x68] sm:$0xff]
          %v1082 = vld [vmem:[%s3 + $0x70] sm:$0xff]
          %v1083 = vld [vmem:[%s3 + $0x78] sm:$0xff]
          %1084 = vmatprep.subr.mxu0 0.0
          %1085 = vmatpush1.msra.mxu0 %v1083
          %1086 = vmatprep.subr.mxu0 0.0
          %1087 = vmatpush1.msra.mxu0 %v1082
          %1088 = vmatprep.subr.mxu0 0.0
          %1089 = vmatpush1.msra.mxu0 %v1081
          %1090 = vmatprep.subr.mxu0 0.0
          %1091 = vmatpush1.msra.mxu0 %v1080
          %1092 = vmatprep.subr.mxu0 0.0
          %1093 = vmatpush1.msra.mxu0 %v1079
          %1094 = vmatprep.subr.mxu0 0.0
          %1095 = vmatpush1.msra.mxu0 %v1078
          %1096 = vmatprep.subr.mxu0 0.0
          %1097 = vmatpush1.msra.mxu0 %v1077
          %1098 = vmatprep.subr.mxu0 0.0
          %1099 = vmatpush1.msra.mxu0 %v1076
          %1100 = vmatprep.subr.mxu0 0.0
          %1101 = vmatpush1.msra.mxu0 %v1075
          %1102 = vmatprep.subr.mxu0 0.0
          %1103 = vmatpush1.msra.mxu0 %v1074
          %1104 = vmatprep.subr.mxu0 0.0
          %1105 = vmatpush1.msra.mxu0 %v1073
          %1106 = vmatprep.subr.mxu0 0.0
          %1107 = vmatpush1.msra.mxu0 %v1072
          %1108 = vmatprep.subr.mxu0 0.0
          %1109 = vmatpush1.msra.mxu0 %v1071
          %1110 = vmatprep.subr.mxu0 0.0
          %1111 = vmatpush1.msra.mxu0 %v1070
          %1112 = vmatprep.subr.mxu0 0.0
          %1113 = vmatpush1.msra.mxu0 %v1069
          %1114 = vmatprep.subr.mxu0 0.0
          %1115 = vmatpush1.msra.mxu0 %v1068
          %1116 = vmatprep.subr.mxu0 0.0
          %1117 = vmatpush2.msra.mxu0 0.0
          %1118 = vmatprep.subr.mxu0 0.0
          %1119 = vmatpush2.msra.mxu0 0.0
          %1120 = vmatprep.subr.mxu0 0.0
          %1121 = vmatpush2.msra.mxu0 0.0
          %1122 = vmatprep.subr.mxu0 0.0
          %1123 = vmatpush2.msra.mxu0 0.0
          %1124 = vmatprep.subr.mxu0 0.0
          %1125 = vmatpush2.msra.mxu0 0.0
          %1126 = vmatprep.subr.mxu0 0.0
          %1127 = vmatpush2.msra.mxu0 0.0
          %1128 = vmatprep.subr.mxu0 0.0
          %1129 = vmatpush2.msra.mxu0 0.0
          %1130 = vmatprep.subr.mxu0 0.0
          %1131 = vmatpush2.msra.mxu0 0.0
          %1132 = vmatprep.subr.mxu0 0.0
          %1133 = vmatpush2.msra.mxu0 0.0
          %1134 = vmatprep.subr.mxu0 0.0
          %1135 = vmatpush2.msra.mxu0 0.0
          %1136 = vmatprep.subr.mxu0 0.0
          %1137 = vmatpush2.msra.mxu0 0.0
          %1138 = vmatprep.subr.mxu0 0.0
          %1139 = vmatpush2.msra.mxu0 0.0
          %1140 = vmatprep.subr.mxu0 0.0
          %1141 = vmatpush2.msra.mxu0 0.0
          %1142 = vmatprep.subr.mxu0 0.0
          %1143 = vmatpush2.msra.mxu0 0.0
          %1144 = vmatprep.subr.mxu0 0.0
          %1145 = vmatpush2.msra.mxu0 0.0
          %1146 = vmatprep.subr.mxu0 0.0
          %1147 = vmatpush2.msra.mxu0 0.0
          %1148 = vmatprep.mubr.f32.mxu0 0.0
          %1149 = vmatmul.mubr.f32.gmra.mxu0 %v1052
          %v1150 = vpop.f32.mrf.mxu0
          %v1151 = vadd.f32 0.0, %v1150
          %v1152 = vpop.f32.mrf.mxu0
          %1153 = vmatprep.mubr.f32.mxu0 0.0
          %1154 = vmatmul.mubr.f32.gmra.mxu0 %v1053
          %v1155 = vpop.f32.mrf.mxu0
          %v1156 = vadd.f32 0.0, %v1155
          %v1157 = vpop.f32.mrf.mxu0
          %1158 = vmatprep.mubr.f32.mxu0 0.0
          %1159 = vmatmul.mubr.f32.gmra.mxu0 %v1054
          %v1160 = vpop.f32.mrf.mxu0
          %v1161 = vadd.f32 0.0, %v1160
          %v1162 = vpop.f32.mrf.mxu0
          %1163 = vmatprep.mubr.f32.mxu0 0.0
          %1164 = vmatmul.mubr.f32.gmra.mxu0 %v1055
          %v1165 = vpop.f32.mrf.mxu0
          %v1166 = vadd.f32 0.0, %v1165
          %v1167 = vpop.f32.mrf.mxu0
          %1168 = vmatprep.mubr.f32.mxu0 0.0
          %1169 = vmatmul.mubr.f32.gmra.mxu0 %v1056
          %v1170 = vpop.f32.mrf.mxu0
          %v1171 = vadd.f32 0.0, %v1170
          %v1172 = vpop.f32.mrf.mxu0
          %1173 = vmatprep.mubr.f32.mxu0 0.0
          %1174 = vmatmul.mubr.f32.gmra.mxu0 %v1057
          %v1175 = vpop.f32.mrf.mxu0
          %v1176 = vadd.f32 0.0, %v1175
          %v1177 = vpop.f32.mrf.mxu0
          %1178 = vmatprep.mubr.f32.mxu0 0.0
          %1179 = vmatmul.mubr.f32.gmra.mxu0 %v1058
          %v1180 = vpop.f32.mrf.mxu0
          %v1181 = vadd.f32 0.0, %v1180
          %v1182 = vpop.f32.mrf.mxu0
          %1183 = vmatprep.mubr.f32.mxu0 0.0
          %1184 = vmatmul.mubr.f32.gmra.mxu0 %v1059
          %v1185 = vpop.f32.mrf.mxu0
          %v1186 = vadd.f32 0.0, %v1185
          %v1187 = vpop.f32.mrf.mxu0
          %1188 = vmatprep.mubr.f32.mxu0 0.0
          %1189 = vmatmul.mubr.f32.gmra.mxu0 %v1060
          %v1190 = vpop.f32.mrf.mxu0
          %v1191 = vadd.f32 0.0, %v1190
          %v1192 = vpop.f32.mrf.mxu0
          %1193 = vmatprep.mubr.f32.mxu0 0.0
          %1194 = vmatmul.mubr.f32.gmra.mxu0 %v1061
          %v1195 = vpop.f32.mrf.mxu0
          %v1196 = vadd.f32 0.0, %v1195
          %v1197 = vpop.f32.mrf.mxu0
          %1198 = vmatprep.mubr.f32.mxu0 0.0
          %1199 = vmatmul.mubr.f32.gmra.mxu0 %v1062
          %v1200 = vpop.f32.mrf.mxu0
          %v1201 = vadd.f32 0.0, %v1200
          %v1202 = vpop.f32.mrf.mxu0
          %1203 = vmatprep.mubr.f32.mxu0 0.0
          %1204 = vmatmul.mubr.f32.gmra.mxu0 %v1063
          %v1205 = vpop.f32.mrf.mxu0
          %v1206 = vadd.f32 0.0, %v1205
          %v1207 = vpop.f32.mrf.mxu0
          %1208 = vmatprep.mubr.f32.mxu0 0.0
          %1209 = vmatmul.mubr.f32.gmra.mxu0 %v1064
          %v1210 = vpop.f32.mrf.mxu0
          %v1211 = vadd.f32 0.0, %v1210
          %v1212 = vpop.f32.mrf.mxu0
          %1213 = vmatprep.mubr.f32.mxu0 0.0
          %1214 = vmatmul.mubr.f32.gmra.mxu0 %v1065
          %v1215 = vpop.f32.mrf.mxu0
          %v1216 = vadd.f32 0.0, %v1215
          %v1217 = vpop.f32.mrf.mxu0
          %1218 = vmatprep.mubr.f32.mxu0 0.0
          %1219 = vmatmul.mubr.f32.gmra.mxu0 %v1066
          %v1220 = vpop.f32.mrf.mxu0
          %v1221 = vadd.f32 0.0, %v1220
          %v1222 = vpop.f32.mrf.mxu0
          %1223 = vmatprep.mubr.f32.mxu0 0.0
          %1224 = vmatmul.mubr.f32.gmra.mxu0 %v1067
          %v1225 = vpop.f32.mrf.mxu0
          %v1226 = vadd.f32 0.0, %v1225
          %v1227 = vpop.f32.mrf.mxu0
          %1228 = vdwg.mxu0
          %1229 = vmatprep.subr.mxu0 0.0
          %1230 = vmatpush1.msra.mxu0 %v1036
          %1231 = vmatprep.subr.mxu0 0.0
          %1232 = vmatpush1.msra.mxu0 %v1035
          %1233 = vmatprep.subr.mxu0 0.0
          %1234 = vmatpush1.msra.mxu0 %v1034
          %1235 = vmatprep.subr.mxu0 0.0
          %1236 = vmatpush1.msra.mxu0 %v1033
          %1237 = vmatprep.subr.mxu0 0.0
          %1238 = vmatpush1.msra.mxu0 %v1032
          %1239 = vmatprep.subr.mxu0 0.0
          %1240 = vmatpush1.msra.mxu0 %v1031
          %1241 = vmatprep.subr.mxu0 0.0
          %1242 = vmatpush1.msra.mxu0 %v1030
          %1243 = vmatprep.subr.mxu0 0.0
          %1244 = vmatpush1.msra.mxu0 %v1029
          %1245 = vmatprep.subr.mxu0 0.0
          %1246 = vmatpush1.msra.mxu0 %v1028
          %1247 = vmatprep.subr.mxu0 0.0
          %1248 = vmatpush1.msra.mxu0 %v1027
          %1249 = vmatprep.subr.mxu0 0.0
          %1250 = vmatpush1.msra.mxu0 %v1026
          %1251 = vmatprep.subr.mxu0 0.0
          %1252 = vmatpush1.msra.mxu0 %v1025
          %1253 = vmatprep.subr.mxu0 0.0
          %1254 = vmatpush1.msra.mxu0 %v1024
          %1255 = vmatprep.subr.mxu0 0.0
          %1256 = vmatpush1.msra.mxu0 %v1023
          %1257 = vmatprep.subr.mxu0 0.0
          %1258 = vmatpush1.msra.mxu0 %v1022
          %1259 = vmatprep.subr.mxu0 0.0
          %1260 = vmatpush1.msra.mxu0 %v1021
          %1261 = vmatprep.subr.mxu0 0.0
          %1262 = vmatpush2.msra.mxu0 0.0
          %1263 = vmatprep.subr.mxu0 0.0
          %1264 = vmatpush2.msra.mxu0 0.0
          %1265 = vmatprep.subr.mxu0 0.0
          %1266 = vmatpush2.msra.mxu0 0.0
          %1267 = vmatprep.subr.mxu0 0.0
          %1268 = vmatpush2.msra.mxu0 0.0
          %1269 = vmatprep.subr.mxu0 0.0
          %1270 = vmatpush2.msra.mxu0 0.0
          %1271 = vmatprep.subr.mxu0 0.0
          %1272 = vmatpush2.msra.mxu0 0.0
          %1273 = vmatprep.subr.mxu0 0.0
          %1274 = vmatpush2.msra.mxu0 0.0
          %1275 = vmatprep.subr.mxu0 0.0
          %1276 = vmatpush2.msra.mxu0 0.0
          %1277 = vmatprep.subr.mxu0 0.0
          %1278 = vmatpush2.msra.mxu0 0.0
          %1279 = vmatprep.subr.mxu0 0.0
          %1280 = vmatpush2.msra.mxu0 0.0
          %1281 = vmatprep.subr.mxu0 0.0
          %1282 = vmatpush2.msra.mxu0 0.0
          %1283 = vmatprep.subr.mxu0 0.0
          %1284 = vmatpush2.msra.mxu0 0.0
          %1285 = vmatprep.subr.mxu0 0.0
          %1286 = vmatpush2.msra.mxu0 0.0
          %1287 = vmatprep.subr.mxu0 0.0
          %1288 = vmatpush2.msra.mxu0 0.0
          %1289 = vmatprep.subr.mxu0 0.0
          %1290 = vmatpush2.msra.mxu0 0.0
          %1291 = vmatprep.subr.mxu0 0.0
          %1292 = vmatpush2.msra.mxu0 0.0
          %1293 = vmatprep.mubr.f32.mxu0 0.0
          %1294 = vmatmul.mubr.f32.gmra.mxu0 %v948
          %v1295 = vpop.f32.mrf.mxu0
          %v1296 = vadd.f32 %v1151, %v1295
          %v1297 = vpop.f32.mrf.mxu0
          %1298 = vmatprep.mubr.f32.mxu0 0.0
          %1299 = vmatmul.mubr.f32.gmra.mxu0 %v949
          %v1300 = vpop.f32.mrf.mxu0
          %v1301 = vadd.f32 %v1156, %v1300
          %v1302 = vpop.f32.mrf.mxu0
          %1303 = vmatprep.mubr.f32.mxu0 0.0
          %1304 = vmatmul.mubr.f32.gmra.mxu0 %v950
          %v1305 = vpop.f32.mrf.mxu0
          %v1306 = vadd.f32 %v1161, %v1305
          %v1307 = vpop.f32.mrf.mxu0
          %1308 = vmatprep.mubr.f32.mxu0 0.0
          %1309 = vmatmul.mubr.f32.gmra.mxu0 %v951
          %v1310 = vpop.f32.mrf.mxu0
          %v1311 = vadd.f32 %v1166, %v1310
          %v1312 = vpop.f32.mrf.mxu0
          %1313 = vmatprep.mubr.f32.mxu0 0.0
          %1314 = vmatmul.mubr.f32.gmra.mxu0 %v952
          %v1315 = vpop.f32.mrf.mxu0
          %v1316 = vadd.f32 %v1171, %v1315
          %v1317 = vpop.f32.mrf.mxu0
          %1318 = vmatprep.mubr.f32.mxu0 0.0
          %1319 = vmatmul.mubr.f32.gmra.mxu0 %v953
          %v1320 = vpop.f32.mrf.mxu0
          %v1321 = vadd.f32 %v1176, %v1320
          %v1322 = vpop.f32.mrf.mxu0
          %1323 = vmatprep.mubr.f32.mxu0 0.0
          %1324 = vmatmul.mubr.f32.gmra.mxu0 %v954
          %v1325 = vpop.f32.mrf.mxu0
          %v1326 = vadd.f32 %v1181, %v1325
          %v1327 = vpop.f32.mrf.mxu0
          %1328 = vmatprep.mubr.f32.mxu0 0.0
          %1329 = vmatmul.mubr.f32.gmra.mxu0 %v955
          %v1330 = vpop.f32.mrf.mxu0
          %v1331 = vadd.f32 %v1186, %v1330
          %v1332 = vpop.f32.mrf.mxu0
          %1333 = vmatprep.mubr.f32.mxu0 0.0
          %1334 = vmatmul.mubr.f32.gmra.mxu0 %v956
          %v1335 = vpop.f32.mrf.mxu0
          %v1336 = vadd.f32 %v1191, %v1335
          %v1337 = vpop.f32.mrf.mxu0
          %1338 = vmatprep.mubr.f32.mxu0 0.0
          %1339 = vmatmul.mubr.f32.gmra.mxu0 %v957
          %v1340 = vpop.f32.mrf.mxu0
          %v1341 = vadd.f32 %v1196, %v1340
          %v1342 = vpop.f32.mrf.mxu0
          %1343 = vmatprep.mubr.f32.mxu0 0.0
          %1344 = vmatmul.mubr.f32.gmra.mxu0 %v958
          %v1345 = vpop.f32.mrf.mxu0
          %v1346 = vadd.f32 %v1201, %v1345
          %v1347 = vpop.f32.mrf.mxu0
          %1348 = vmatprep.mubr.f32.mxu0 0.0
          %1349 = vmatmul.mubr.f32.gmra.mxu0 %v959
          %v1350 = vpop.f32.mrf.mxu0
          %v1351 = vadd.f32 %v1206, %v1350
          %v1352 = vpop.f32.mrf.mxu0
          %1353 = vmatprep.mubr.f32.mxu0 0.0
          %1354 = vmatmul.mubr.f32.gmra.mxu0 %v960
          %v1355 = vpop.f32.mrf.mxu0
          %v1356 = vadd.f32 %v1211, %v1355
          %v1357 = vpop.f32.mrf.mxu0
          %1358 = vmatprep.mubr.f32.mxu0 0.0
          %1359 = vmatmul.mubr.f32.gmra.mxu0 %v961
          %v1360 = vpop.f32.mrf.mxu0
          %v1361 = vadd.f32 %v1216, %v1360
          %v1362 = vpop.f32.mrf.mxu0
          %1363 = vmatprep.mubr.f32.mxu0 0.0
          %1364 = vmatmul.mubr.f32.gmra.mxu0 %v962
          %v1365 = vpop.f32.mrf.mxu0
          %v1366 = vadd.f32 %v1221, %v1365
          %v1367 = vpop.f32.mrf.mxu0
          %1368 = vmatprep.mubr.f32.mxu0 0.0
          %1369 = vmatmul.mubr.f32.gmra.mxu0 %v963
          %v1370 = vpop.f32.mrf.mxu0
          %v1371 = vadd.f32 %v1226, %v1370
          %v1372 = vpop.f32.mrf.mxu0
          %1373 = vdwg.mxu0
          %p1374 = scmp.lt.s32.totalorder %s26, 0
          %s1375 = ssub.s32 0, %s26
          %s1376 = scalar_select %p1374, %s1375, %s26
          %s1377 = sdiv.u32.pop %s1376, 3
          %s1378 = srem.u32.pop %s1376, 3
          %s1379 = ssub.s32 0, %s1378
          %s1380 = scalar_select %p1374, %s1379, %s1378
          %p1381 = scmp.ne.s32.totalorder %s1380, 0
          %p1382 = scmp.lt.s32.totalorder %s1380, 0
          %p1383 = pnand %p1382, %p1381
          %p1384 = pneg %p1383
          %s1385 = sadd.s32 %s1380, 3
          %s1386 = scalar_select %p1384, %s1385, %s1380
          %s1387 = smul.u32 %s1386, 128
          %s1388 = scalar_lea.vmem [#allocation2], %s1387
          %v1389 = vld [vmem:[%s1388] sm:$0xff]
          %v1390 = vld [vmem:[%s1388 + $0x8] sm:$0xff]
          %v1391 = vld [vmem:[%s1388 + $0x10] sm:$0xff]
          %v1392 = vld [vmem:[%s1388 + $0x18] sm:$0xff]
          %v1393 = vld [vmem:[%s1388 + $0x20] sm:$0xff]
          %v1394 = vld [vmem:[%s1388 + $0x28] sm:$0xff]
          %v1395 = vld [vmem:[%s1388 + $0x30] sm:$0xff]
          %v1396 = vld [vmem:[%s1388 + $0x38] sm:$0xff]
          %v1397 = vld [vmem:[%s1388 + $0x40] sm:$0xff]
          %v1398 = vld [vmem:[%s1388 + $0x48] sm:$0xff]
          %v1399 = vld [vmem:[%s1388 + $0x50] sm:$0xff]
          %v1400 = vld [vmem:[%s1388 + $0x58] sm:$0xff]
          %v1401 = vld [vmem:[%s1388 + $0x60] sm:$0xff]
          %v1402 = vld [vmem:[%s1388 + $0x68] sm:$0xff]
          %v1403 = vld [vmem:[%s1388 + $0x70] sm:$0xff]
          %v1404 = vld [vmem:[%s1388 + $0x78] sm:$0xff]
          %s1405 = scalar_lea.vmem %s3, 128
          %v1406 = vld [vmem:[%s1405] sm:$0xff]
          %v1407 = vld [vmem:[%s1405 + $0x8] sm:$0xff]
          %v1408 = vld [vmem:[%s1405 + $0x10] sm:$0xff]
          %v1409 = vld [vmem:[%s1405 + $0x18] sm:$0xff]
          %v1410 = vld [vmem:[%s1405 + $0x20] sm:$0xff]
          %v1411 = vld [vmem:[%s1405 + $0x28] sm:$0xff]
          %v1412 = vld [vmem:[%s1405 + $0x30] sm:$0xff]
          %v1413 = vld [vmem:[%s1405 + $0x38] sm:$0xff]
          %v1414 = vld [vmem:[%s1405 + $0x40] sm:$0xff]
          %v1415 = vld [vmem:[%s1405 + $0x48] sm:$0xff]
          %v1416 = vld [vmem:[%s1405 + $0x50] sm:$0xff]
          %v1417 = vld [vmem:[%s1405 + $0x58] sm:$0xff]
          %v1418 = vld [vmem:[%s1405 + $0x60] sm:$0xff]
          %v1419 = vld [vmem:[%s1405 + $0x68] sm:$0xff]
          %v1420 = vld [vmem:[%s1405 + $0x70] sm:$0xff]
          %v1421 = vld [vmem:[%s1405 + $0x78] sm:$0xff]
          %1422 = vmatprep.subr.mxu0 0.0
          %1423 = vmatpush1.msra.mxu0 %v1421
          %1424 = vmatprep.subr.mxu0 0.0
          %1425 = vmatpush1.msra.mxu0 %v1420
          %1426 = vmatprep.subr.mxu0 0.0
          %1427 = vmatpush1.msra.mxu0 %v1419
          %1428 = vmatprep.subr.mxu0 0.0
          %1429 = vmatpush1.msra.mxu0 %v1418
          %1430 = vmatprep.subr.mxu0 0.0
          %1431 = vmatpush1.msra.mxu0 %v1417
          %1432 = vmatprep.subr.mxu0 0.0
          %1433 = vmatpush1.msra.mxu0 %v1416
          %1434 = vmatprep.subr.mxu0 0.0
          %1435 = vmatpush1.msra.mxu0 %v1415
          %1436 = vmatprep.subr.mxu0 0.0
          %1437 = vmatpush1.msra.mxu0 %v1414
          %1438 = vmatprep.subr.mxu0 0.0
          %1439 = vmatpush1.msra.mxu0 %v1413
          %1440 = vmatprep.subr.mxu0 0.0
          %1441 = vmatpush1.msra.mxu0 %v1412
          %1442 = vmatprep.subr.mxu0 0.0
          %1443 = vmatpush1.msra.mxu0 %v1411
          %1444 = vmatprep.subr.mxu0 0.0
          %1445 = vmatpush1.msra.mxu0 %v1410
          %1446 = vmatprep.subr.mxu0 0.0
          %1447 = vmatpush1.msra.mxu0 %v1409
          %1448 = vmatprep.subr.mxu0 0.0
          %1449 = vmatpush1.msra.mxu0 %v1408
          %1450 = vmatprep.subr.mxu0 0.0
          %1451 = vmatpush1.msra.mxu0 %v1407
          %1452 = vmatprep.subr.mxu0 0.0
          %1453 = vmatpush1.msra.mxu0 %v1406
          %1454 = vmatprep.subr.mxu0 0.0
          %1455 = vmatpush2.msra.mxu0 0.0
          %1456 = vmatprep.subr.mxu0 0.0
          %1457 = vmatpush2.msra.mxu0 0.0
          %1458 = vmatprep.subr.mxu0 0.0
          %1459 = vmatpush2.msra.mxu0 0.0
          %1460 = vmatprep.subr.mxu0 0.0
          %1461 = vmatpush2.msra.mxu0 0.0
          %1462 = vmatprep.subr.mxu0 0.0
          %1463 = vmatpush2.msra.mxu0 0.0
          %1464 = vmatprep.subr.mxu0 0.0
          %1465 = vmatpush2.msra.mxu0 0.0
          %1466 = vmatprep.subr.mxu0 0.0
          %1467 = vmatpush2.msra.mxu0 0.0
          %1468 = vmatprep.subr.mxu0 0.0
          %1469 = vmatpush2.msra.mxu0 0.0
          %1470 = vmatprep.subr.mxu0 0.0
          %1471 = vmatpush2.msra.mxu0 0.0
          %1472 = vmatprep.subr.mxu0 0.0
          %1473 = vmatpush2.msra.mxu0 0.0
          %1474 = vmatprep.subr.mxu0 0.0
          %1475 = vmatpush2.msra.mxu0 0.0
          %1476 = vmatprep.subr.mxu0 0.0
          %1477 = vmatpush2.msra.mxu0 0.0
          %1478 = vmatprep.subr.mxu0 0.0
          %1479 = vmatpush2.msra.mxu0 0.0
          %1480 = vmatprep.subr.mxu0 0.0
          %1481 = vmatpush2.msra.mxu0 0.0
          %1482 = vmatprep.subr.mxu0 0.0
          %1483 = vmatpush2.msra.mxu0 0.0
          %1484 = vmatprep.subr.mxu0 0.0
          %1485 = vmatpush2.msra.mxu0 0.0
          %1486 = vmatprep.mubr.f32.mxu0 0.0
          %1487 = vmatmul.mubr.f32.gmra.mxu0 %v1389
          %v1488 = vpop.f32.mrf.mxu0
          %v1489 = vadd.f32 0.0, %v1488
          %v1490 = vpop.f32.mrf.mxu0
          %1491 = vmatprep.mubr.f32.mxu0 0.0
          %1492 = vmatmul.mubr.f32.gmra.mxu0 %v1390
          %v1493 = vpop.f32.mrf.mxu0
          %v1494 = vadd.f32 0.0, %v1493
          %v1495 = vpop.f32.mrf.mxu0
          %1496 = vmatprep.mubr.f32.mxu0 0.0
          %1497 = vmatmul.mubr.f32.gmra.mxu0 %v1391
          %v1498 = vpop.f32.mrf.mxu0
          %v1499 = vadd.f32 0.0, %v1498
          %v1500 = vpop.f32.mrf.mxu0
          %1501 = vmatprep.mubr.f32.mxu0 0.0
          %1502 = vmatmul.mubr.f32.gmra.mxu0 %v1392
          %v1503 = vpop.f32.mrf.mxu0
          %v1504 = vadd.f32 0.0, %v1503
          %v1505 = vpop.f32.mrf.mxu0
          %1506 = vmatprep.mubr.f32.mxu0 0.0
          %1507 = vmatmul.mubr.f32.gmra.mxu0 %v1393
          %v1508 = vpop.f32.mrf.mxu0
          %v1509 = vadd.f32 0.0, %v1508
          %v1510 = vpop.f32.mrf.mxu0
          %1511 = vmatprep.mubr.f32.mxu0 0.0
          %1512 = vmatmul.mubr.f32.gmra.mxu0 %v1394
          %v1513 = vpop.f32.mrf.mxu0
          %v1514 = vadd.f32 0.0, %v1513
          %v1515 = vpop.f32.mrf.mxu0
          %1516 = vmatprep.mubr.f32.mxu0 0.0
          %1517 = vmatmul.mubr.f32.gmra.mxu0 %v1395
          %v1518 = vpop.f32.mrf.mxu0
          %v1519 = vadd.f32 0.0, %v1518
          %v1520 = vpop.f32.mrf.mxu0
          %1521 = vmatprep.mubr.f32.mxu0 0.0
          %1522 = vmatmul.mubr.f32.gmra.mxu0 %v1396
          %v1523 = vpop.f32.mrf.mxu0
          %v1524 = vadd.f32 0.0, %v1523
          %v1525 = vpop.f32.mrf.mxu0
          %1526 = vmatprep.mubr.f32.mxu0 0.0
          %1527 = vmatmul.mubr.f32.gmra.mxu0 %v1397
          %v1528 = vpop.f32.mrf.mxu0
          %v1529 = vadd.f32 0.0, %v1528
          %v1530 = vpop.f32.mrf.mxu0
          %1531 = vmatprep.mubr.f32.mxu0 0.0
          %1532 = vmatmul.mubr.f32.gmra.mxu0 %v1398
          %v1533 = vpop.f32.mrf.mxu0
          %v1534 = vadd.f32 0.0, %v1533
          %v1535 = vpop.f32.mrf.mxu0
          %1536 = vmatprep.mubr.f32.mxu0 0.0
          %1537 = vmatmul.mubr.f32.gmra.mxu0 %v1399
          %v1538 = vpop.f32.mrf.mxu0
          %v1539 = vadd.f32 0.0, %v1538
          %v1540 = vpop.f32.mrf.mxu0
          %1541 = vmatprep.mubr.f32.mxu0 0.0
          %1542 = vmatmul.mubr.f32.gmra.mxu0 %v1400
          %v1543 = vpop.f32.mrf.mxu0
          %v1544 = vadd.f32 0.0, %v1543
          %v1545 = vpop.f32.mrf.mxu0
          %1546 = vmatprep.mubr.f32.mxu0 0.0
          %1547 = vmatmul.mubr.f32.gmra.mxu0 %v1401
          %v1548 = vpop.f32.mrf.mxu0
          %v1549 = vadd.f32 0.0, %v1548
          %v1550 = vpop.f32.mrf.mxu0
          %1551 = vmatprep.mubr.f32.mxu0 0.0
          %1552 = vmatmul.mubr.f32.gmra.mxu0 %v1402
          %v1553 = vpop.f32.mrf.mxu0
          %v1554 = vadd.f32 0.0, %v1553
          %v1555 = vpop.f32.mrf.mxu0
          %1556 = vmatprep.mubr.f32.mxu0 0.0
          %1557 = vmatmul.mubr.f32.gmra.mxu0 %v1403
          %v1558 = vpop.f32.mrf.mxu0
          %v1559 = vadd.f32 0.0, %v1558
          %v1560 = vpop.f32.mrf.mxu0
          %1561 = vmatprep.mubr.f32.mxu0 0.0
          %1562 = vmatmul.mubr.f32.gmra.mxu0 %v1404
          %v1563 = vpop.f32.mrf.mxu0
          %v1564 = vadd.f32 0.0, %v1563
          %v1565 = vpop.f32.mrf.mxu0
          %1566 = vdwg.mxu0
          %v1567 = vadd.f32 %v1296, %v1489
          %v1568 = vadd.f32 %v1301, %v1494
          %v1569 = vadd.f32 %v1306, %v1499
          %v1570 = vadd.f32 %v1311, %v1504
          %v1571 = vadd.f32 %v1316, %v1509
          %v1572 = vadd.f32 %v1321, %v1514
          %v1573 = vadd.f32 %v1326, %v1519
          %v1574 = vadd.f32 %v1331, %v1524
          %v1575 = vadd.f32 %v1336, %v1529
          %v1576 = vadd.f32 %v1341, %v1534
          %v1577 = vadd.f32 %v1346, %v1539
          %v1578 = vadd.f32 %v1351, %v1544
          %v1579 = vadd.f32 %v1356, %v1549
          %v1580 = vadd.f32 %v1361, %v1554
          %v1581 = vadd.f32 %v1366, %v1559
          %v1582 = vadd.f32 %v1371, %v1564
          %v1583 = vld [vmem:[%s4] sm:$0x1]
          %v1585 = vlaneseq
          %v1586 = vshrl.u32 %v1585, 7
          %v1587 = vsub.s32 0, %v1586
          %v1588 = vrot.slane %v1583, %v1587
          %v1590 = vadd.f32 %v1567, %v1588
          %v1591 = vadd.f32 %v1568, %v1588
          %v1592 = vadd.f32 %v1569, %v1588
          %v1593 = vadd.f32 %v1570, %v1588
          %v1594 = vadd.f32 %v1571, %v1588
          %v1595 = vadd.f32 %v1572, %v1588
          %v1596 = vadd.f32 %v1573, %v1588
          %v1597 = vadd.f32 %v1574, %v1588
          %v1598 = vadd.f32 %v1575, %v1588
          %v1599 = vadd.f32 %v1576, %v1588
          %v1600 = vadd.f32 %v1577, %v1588
          %v1601 = vadd.f32 %v1578, %v1588
          %v1602 = vadd.f32 %v1579, %v1588
          %v1603 = vadd.f32 %v1580, %v1588
          %v1604 = vadd.f32 %v1581, %v1588
          %v1605 = vadd.f32 %v1582, %v1588
          %1606 = vst [vmem:[%s286] sm:$0xff] %v1590
          %1607 = vst [vmem:[%s286 + $0x8] sm:$0xff] %v1591
          %1608 = vst [vmem:[%s286 + $0x10] sm:$0xff] %v1592
          %1609 = vst [vmem:[%s286 + $0x18] sm:$0xff] %v1593
          %1610 = vst [vmem:[%s286 + $0x20] sm:$0xff] %v1594
          %1611 = vst [vmem:[%s286 + $0x28] sm:$0xff] %v1595
          %1612 = vst [vmem:[%s286 + $0x30] sm:$0xff] %v1596
          %1613 = vst [vmem:[%s286 + $0x38] sm:$0xff] %v1597
          %1614 = vst [vmem:[%s286 + $0x40] sm:$0xff] %v1598
          %1615 = vst [vmem:[%s286 + $0x48] sm:$0xff] %v1599
          %1616 = vst [vmem:[%s286 + $0x50] sm:$0xff] %v1600
          %1617 = vst [vmem:[%s286 + $0x58] sm:$0xff] %v1601
          %1618 = vst [vmem:[%s286 + $0x60] sm:$0xff] %v1602
          %1619 = vst [vmem:[%s286 + $0x68] sm:$0xff] %v1603
          %1620 = vst [vmem:[%s286 + $0x70] sm:$0xff] %v1604
          %1621 = vst [vmem:[%s286 + $0x78] sm:$0xff] %v1605
        $region48: #{tpu_custom_call.1} parent=39 // pred_fallthru
          _
        %s1622 = sand.u32 %s178, 1
        %s1623 = scalar_lea.sflag [#allocation4], %s1622
        %s1624 = sand.u32 %s178, 1
        %s1625 = smul.addr %s1624, 128
        %s1626 = scalar_lea.vmem [#allocation3], %s1625
        // Predicated region
        $region49: #{tpu_custom_call.1} parent=39 // pred_check
          %p1627 = pneg %p188
        $region50: #{tpu_custom_call.1} parent=39 // pred_check_branch
          %1629 = sbr.rel (%p1627) target = $region52
        $region51: #{tpu_custom_call.1} parent=39 // pred_region
          %s1630 = sadd.s32 %s26, 4294967295
          %p1631 = scmp.gt.s32.totalorder %s1630, 0
          %s1632 = scalar_select %p1631, %s1630, 0
          %s1634 = ssub.s32 2048, 2048
          %1635 = vsyncadd %s1623, %s1634
          %s1636 = smul.addr %s25, 16
          %s1637 = smul.addr %s1632, 32
          %s1638 = sadd.s32 %s1636, %s1637
          %s1639 = smul.addr %s24, 256
          %s1640 = sadd.s32 %s1638, %s1639
          %s1641 = smul.addr %s1640, 128
          %s1642 = scalar_lea.hbm %s5, %s1641
          %s1643 = sshll.u32 %s1626, 4
          %s1644 = int_to_ptr.vmem [resolvable:$true] %s1643
          %1649 = dma.vmem_to_hbm [thread:$0]  %s1644, 2048, %s1642, %s1623, 128, 128, 8
        $region52: #{tpu_custom_call.1} parent=39 // pred_fallthru
          _
      $region40: #{tpu_custom_call.1} parent=5 // pred_fallthru
        _
      %p1650 = scmp.le.s32.totalorder 2, %s14
      // Predicated region
      $region53: #{tpu_custom_call.1} parent=5 // pred_check
        %p1651 = pneg %p1650
      $region54: #{tpu_custom_call.1} parent=5 // pred_check_branch
        %1653 = sbr.rel (%p1651) target = $region56
      $region55: #{tpu_custom_call.1} parent=5 // pred_region
        %s1654 = ssub.s32 %s14, 2
        // Predicated region
        $region57: #{tpu_custom_call.1} parent=55 // pred_check
          %p1655 = pneg %p194
        $region58: #{tpu_custom_call.1} parent=55 // pred_check_branch
          %1657 = sbr.rel (%p1655) target = $region60
        $region59: #{tpu_custom_call.1} parent=55 // pred_region
          %s1658 = sand.u32 %s179, 1
          %s1659 = scalar_lea.sflag [#allocation4], %s1658
          %s1660 = sand.u32 %s179, 1
          %s1661 = smul.addr %s1660, 128
          %s1662 = scalar_lea.vmem [#allocation3], %s1661
          %1663 = dma.done %s1659, 2048
        $region60: #{tpu_custom_call.1} parent=55 // pred_fallthru
          _
      $region56: #{tpu_custom_call.1} parent=5 // pred_fallthru
        _
    $region6: #{tpu_custom_call.1} parent=1 // loop_footer
      %s18 = sadd.s32 1, %s14
    $region7: #{tpu_custom_call.1} parent=1 // loop_footer_branch
      %13 = sbr.rel target = $region3
    $region8: #{tpu_custom_call.1} parent=1 // loop_exit
      _
    %1664 = vsyncpa [#allocation4], 1
    %s1665 = scalar_lea.sflag [#allocation4], 1
    %1666 = vsyncpa %s1665, 1

</llo_original>
